<compile_context>
chip_gen: v6e
topology: v6e:2x2x1
jax: 0.10.0
libtpu: 0.0.40
codegen_flags: <defaults>
</compile_context>

<pallas_src>
import math
import functools

import jax
import jax.numpy as jnp
from jax import lax
from jax.experimental import pallas as pl
from jax.experimental.pallas import tpu as pltpu


def _round_up(x, m):
    return ((x + m - 1) // m) * m


def _vmem_bytes(Bb, chunk, H, I_pad):
    """Rough VMEM footprint (bytes) of one pipeline configuration."""
    Hl = _round_up(H, 128)        # lane padding of an H-wide tile
    G = _round_up(4 * H, 128)     # lane padding of the fused 4H gate axis
    Hs = _round_up(H, 8)          # sublane padding of Wh's leading dim
    x_in = 2 * chunk * Bb * I_pad * 4      # double-buffered X block
    h_out = 2 * chunk * Bb * Hl * 4        # double-buffered hseq block
    wx = 1 * I_pad * G * 4                 # single-buffered (Buffered(1))
    wh = 1 * Hs * G * 4                    # single-buffered (Buffered(1))
    fin = 2 * 2 * Bb * Hl * 4              # hfin + sfin output blocks
    scr = 2 * Bb * Hl * 4                  # h/s carry scratch
    return x_in + h_out + wx + wh + fin + scr


def _lstm_kernel(x_ref, wx_ref, wh_ref, hseq_ref, hfin_ref, sfin_ref,
                 h_scr, s_scr, *, hidden_size, chunk, last_step):
    """One grid step == one (batch block, time chunk).

    x_ref    : (chunk, Bb, I_pad) time-major inputs; column I is all-ones (bias).
    wx_ref   : (I_pad, 4H) input->gates weights (bias folded into row I,
               sigmoid 0.5 pre-scale baked in).  Loop invariant, single-buffered.
    wh_ref   : (H, 4H) hidden->gates weights (same pre-scale).  Loop invariant.
    hseq_ref : (chunk, Bb, H) time-major per-timestep hidden outputs.
    hfin_ref : (Bb, H) final hidden state (written only at t == last_step).
    sfin_ref : (Bb, H) final cell state.
    h_scr/s_scr : (Bb, H) f32 VMEM scratch carrying the recurrent state across chunks.
    """
    ti = pl.program_id(1)          # time-chunk index (innermost, "arbitrary")

    @pl.when(ti == 0)
    def _init():
        h_scr[...] = jnp.zeros_like(h_scr)
        s_scr[...] = jnp.zeros_like(s_scr)

    hs = hidden_size
    wx = wx_ref[...]
    wh = wh_ref[...]
    h = h_scr[...]
    s = s_scr[...]

    # Statically unrolled inner loop over the chunk (chunk is small & static).
    # TODO(synk): if the bundle dump shows vreg spills at chunk=16, switch to
    # lax.fori_loop(..., unroll=4) to bound live ranges.
    for tl in range(chunk):
        # Input projection: leading-axis static index -> dense (Bb, I_pad) tile
        # load; no dependence on h, so the scheduler overlaps its MXU pushes
        # with the previous step's EUP/VPU gate math.  Only h@Wh is on the
        # sequential critical path.
        z = (jnp.dot(x_ref[tl], wx, preferred_element_type=jnp.float32)
             + jnp.dot(h, wh, preferred_element_type=jnp.float32))

        # One fused EUP tanh over the whole 4H gate axis; the 0.5 pre-scale of
        # the f/i/o sigmoid gates is already baked into Wx/Wh/b in the wrapper,
        # so sigmoid(x) == 0.5 * tanh(0.5 x) + 0.5 == 0.5 * t + 0.5 here.
        t = jnp.tanh(z)
        f_t = 0.5 * t[:, 0 * hs:1 * hs] + 0.5
        i_t = 0.5 * t[:, 1 * hs:2 * hs] + 0.5
        c_t = t[:, 2 * hs:3 * hs]
        o_t = 0.5 * t[:, 3 * hs:4 * hs] + 0.5

        s = f_t * s + i_t * c_t
        h = o_t * jnp.tanh(s)

        hseq_ref[tl] = h           # leading-axis static index -> dense store

        # Final-state stores only on the exact last (unpadded) timestep.
        @pl.when(ti * chunk + tl == last_step)
        def _store_final(h=h, s=s):
            hfin_ref[...] = h
            sfin_ref[...] = s

    h_scr[...] = h
    s_scr[...] = s

    # TODO(synk): for latency-bound cases (small H / small B) split the batch
    # block into two halves with a one-step skew so one half's h@Wh (MXU)
    # overlaps the other half's tanh (EUP) and gate math (VPU).


def emi_lstm_forward(X, params, *, chunk=16):
    """X: [batch, seq, input] (PyTorch layout).  Returns
    (hidden_sequences [batch, seq, hidden], (H_t [hidden, batch], S_t [hidden, batch]))."""
    Wf, bf, Wi, bi, Wc, bc, Wo, bo = (params[k] for k in
                                      ("Wf", "bf", "Wi", "bi", "Wc", "bc", "Wo", "bo"))
    B, S, I = X.shape
    H = Wf.shape[0]

    # --- Repack weights.  PyTorch does W @ cat(X_t, H_t) with W:[H, I+H]:
    #     W[:, :I] hits the input, W[:, I:] hits the hidden state.
    def split(W):
        return W[:, :I].T, W[:, I:].T          # -> (I, H), (H, H)

    wxf, whf = split(Wf)
    wxi, whi = split(Wi)
    wxc, whc = split(Wc)
    wxo, who = split(Wo)
    Wx = jnp.concatenate([wxf, wxi, wxc, wxo], axis=1).astype(jnp.float32)      # (I, 4H)
    Wh = jnp.concatenate([whf, whi, whc, who], axis=1).astype(jnp.float32)      # (H, 4H)
    b = jnp.concatenate([bf.T, bi.T, bc.T, bo.T], axis=1).astype(jnp.float32)   # (1, 4H)

    # Bake the sigmoid-via-tanh 0.5 pre-scale (f/i/o gate columns) into the
    # weights so the kernel only needs one fused tanh per step.  Exact in f32.
    gate_scale = jnp.concatenate([jnp.full((1, 2 * H), 0.5, jnp.float32),
                                  jnp.ones((1, H), jnp.float32),
                                  jnp.full((1, H), 0.5, jnp.float32)], axis=1)
    Wx = Wx * gate_scale
    Wh = Wh * gate_scale
    b = b * gate_scale
    # TODO(synk): optionally cast Wh (and h) to bf16 for large H to halve weight
    # VMEM / vld traffic — kept f32 here for parity with the f32 reference.

    # Fold the bias into the input weights via an all-ones input column; pad the
    # input axis to a lane multiple for clean layouts.
    I_pad = _round_up(I + 1, 128)
    Wx_aug = jnp.zeros((I_pad, 4 * H), jnp.float32).at[:I].set(Wx).at[I].set(b[0])

    # --- Block sizing (per-generation safe VMEM budget).
    chunk = max(1, min(chunk, S))
    B8 = _round_up(B, 8)
    if 16 <= B8 <= 256:
        Bb = _round_up(B8 // 2, 8)     # >=2 batch blocks so v7x megacore splits the batch axis
    else:
        Bb = min(128, B8)
    # TODO(synk): on v6e with large B and spare VMEM, Bb=256 fills the 256-row MXU.
    budget = 44 * (1 << 20)            # stay comfortably under v7x's 64 MiB physical VMEM
    while _vmem_bytes(Bb, chunk, H, I_pad) > budget and chunk > 2:
        chunk = max(2, chunk // 2)
    while _vmem_bytes(Bb, chunk, H, I_pad) > budget and Bb > 8:
        Bb = max(8, Bb // 2)
    S_pad = _round_up(S, chunk)
    B_pad = _round_up(B8, Bb)
    NB, NT = B_pad // Bb, S_pad // chunk
    vmem_limit = int(min(64 * (1 << 20),
                         max(32 * (1 << 20),
                             _vmem_bytes(Bb, chunk, H, I_pad) + (8 << 20))))

    # --- Time-major input with the bias ("ones") column folded in.
    X_tm = jnp.zeros((S_pad, B_pad, I_pad), jnp.float32)
    X_tm = X_tm.at[:S, :B, :I].set(jnp.transpose(X, (1, 0, 2)).astype(jnp.float32))
    X_tm = X_tm.at[:, :, I].set(1.0)

    kernel = functools.partial(_lstm_kernel, hidden_size=H, chunk=chunk,
                               last_step=S - 1)

    hseq_tm, hfin, sfin = pl.pallas_call(
        kernel,
        out_shape=(
            jax.ShapeDtypeStruct((S_pad, B_pad, H), jnp.float32),
            jax.ShapeDtypeStruct((B_pad, H), jnp.float32),
            jax.ShapeDtypeStruct((B_pad, H), jnp.float32),
        ),
        grid_spec=pltpu.PrefetchScalarGridSpec(
            num_scalar_prefetch=0,
            grid=(NB, NT),
            in_specs=[
                # Time-major X blocks: per-step access is a leading-axis index.
                pl.BlockSpec((chunk, Bb, I_pad), lambda bblk, tblk: (tblk, bblk, 0)),
                # Loop-invariant weights: single-buffered to save VMEM.
                pl.BlockSpec((I_pad, 4 * H), lambda bblk, tblk: (0, 0),
                             pipeline_mode=pl.Buffered(1)),
                pl.BlockSpec((H, 4 * H), lambda bblk, tblk: (0, 0),
                             pipeline_mode=pl.Buffered(1)),
            ],
            out_specs=[
                pl.BlockSpec((chunk, Bb, H), lambda bblk, tblk: (tblk, bblk, 0)),
                pl.BlockSpec((Bb, H), lambda bblk, tblk: (bblk, 0)),
                pl.BlockSpec((Bb, H), lambda bblk, tblk: (bblk, 0)),
            ],
            scratch_shapes=[
                pltpu.VMEM((Bb, H), jnp.float32),   # H_t carry across time chunks
                pltpu.VMEM((Bb, H), jnp.float32),   # S_t carry across time chunks
            ],
        ),
        compiler_params=pltpu.CompilerParams(
            # batch blocks are independent (megacore-parallel); time is sequential.
            dimension_semantics=("parallel", "arbitrary"),
            vmem_limit_bytes=vmem_limit,
        ),
    )(X_tm, Wx_aug, Wh)

    # One XLA transpose instead of S per-step sublane relayouts in the kernel.
    hidden_sequences = jnp.transpose(hseq_tm[:S, :B, :], (1, 0, 2))   # [batch, seq, hidden]
    H_t = hfin[:B].T                       # [hidden, batch] (PyTorch convention)
    S_t = sfin[:B].T                       # [hidden, batch]
    return hidden_sequences, (H_t, S_t)


def init_params(key, input_size, hidden_size):
    """Matches emiLSTM_ver1.init_weights(): uniform(-stdv, stdv), stdv = 1/sqrt(hidden)."""
    stdv = 1.0 / math.sqrt(hidden_size)
    names = ["Wf", "bf", "Wi", "bi", "Wc", "bc", "Wo", "bo"]
    shapes = {
        "Wf": (hidden_size, hidden_size + input_size), "bf": (hidden_size, 1),
        "Wi": (hidden_size, hidden_size + input_size), "bi": (hidden_size, 1),
        "Wc": (hidden_size, hidden_size + input_size), "bc": (hidden_size, 1),
        "Wo": (hidden_size, hidden_size + input_size), "bo": (hidden_size, 1),
    }
    keys = jax.random.split(key, len(names))
    return {n: jax.random.uniform(k, shapes[n], jnp.float32, -stdv, stdv)
            for n, k in zip(names, keys)}


def _reference_forward(X, params):
    """Pure-JAX reference mirroring the PyTorch forward, for verification."""
    Wf, bf, Wi, bi, Wc, bc, Wo, bo = (params[k] for k in
                                      ("Wf", "bf", "Wi", "bi", "Wc", "bc", "Wo", "bo"))
    B, S, I = X.shape
    H = Wf.shape[0]
    Xt = jnp.transpose(X, (1, 2, 0))    # [seq, input, batch]
    hi = lax.Precision.HIGHEST

    def step(carry, x_t):
        H_t, S_t = carry
        XH = jnp.concatenate([x_t, H_t], axis=0)          # [I+H, B]
        F_t = jax.nn.sigmoid(jnp.matmul(Wf, XH, precision=hi) + bf)
        I_t = jax.nn.sigmoid(jnp.matmul(Wi, XH, precision=hi) + bi)
        C_t = jnp.tanh(jnp.matmul(Wc, XH, precision=hi) + bc)
        S_n = F_t * S_t + I_t * C_t
        O_t = jax.nn.sigmoid(jnp.matmul(Wo, XH, precision=hi) + bo)
        H_n = O_t * jnp.tanh(S_n)
        return (H_n, S_n), H_n

    (H_f, S_f), hs = lax.scan(step, (jnp.zeros((H, B)), jnp.zeros((H, B))), Xt)
    hidden_sequences = jnp.transpose(hs, (2, 0, 1))       # [batch, seq, hidden]
    return hidden_sequences, (H_f, S_f)


if __name__ == "__main__":
    batch, seq, input_size, hidden_size = 2, 8, 16, 32

    key = jax.random.PRNGKey(0)
    k_param, k_x = jax.random.split(key)
    params = init_params(k_param, input_size, hidden_size)
    X = jax.random.normal(k_x, (batch, seq, input_size), jnp.float32)

    hseq, (H_t, S_t) = emi_lstm_forward(X, params)
    jax.block_until_ready((hseq, H_t, S_t))

    # Verify against the pure-JAX reference of the PyTorch forward.
    # (Tolerance allows for MXU matmul pass differences vs. the HIGHEST-precision
    #  reference; a structurally wrong kernel would be off by O(0.1).)
    hseq_r, (H_r, S_r) = _reference_forward(X, params)
    assert hseq.shape == (batch, seq, hidden_size)
    assert H_t.shape == (hidden_size, batch) and S_t.shape == (hidden_size, batch)
    assert jnp.allclose(hseq, hseq_r, atol=2e-3), "hidden sequence mismatch"
    assert jnp.allclose(H_t, H_r, atol=2e-3), "final H mismatch"
    assert jnp.allclose(S_t, S_r, atol=2e-3), "final S mismatch"

    print("KERNEL_OK")
</pallas_src>

<mosaic_0001>
module attributes {stable_mosaic.version = 11 : i64} {
  func.func @_lstm_kernel(%arg0: i32, %arg1: i32, %arg2: memref<8x8x128xf32, #tpu.memory_space<vmem>>, %arg3: memref<128x128xf32, #tpu.memory_space<vmem>>, %arg4: memref<32x128xf32, #tpu.memory_space<vmem>>, %arg5: memref<8x8x32xf32, #tpu.memory_space<vmem>>, %arg6: memref<8x32xf32, #tpu.memory_space<vmem>>, %arg7: memref<8x32xf32, #tpu.memory_space<vmem>>, %arg8: memref<8x32xf32, #tpu.memory_space<vmem>>, %arg9: memref<8x32xf32, #tpu.memory_space<vmem>>) attributes {dimension_semantics = [#tpu.dimension_semantics<parallel>, #tpu.dimension_semantics<arbitrary>], iteration_bounds = array<i64: 1, 1>, scalar_prefetch = 0 : i64, scratch_operands = 2 : i64, tpu.core_type = #tpu.core_type<tc>, window_params = [{transform_indices = @transform_0, window_bounds = array<i64: 8, 8, 128>}, {pipeline_mode = #tpu.pipeline_mode<synchronous>, transform_indices = @transform_1, window_bounds = array<i64: 128, 128>}, {pipeline_mode = #tpu.pipeline_mode<synchronous>, transform_indices = @transform_2, window_bounds = array<i64: 32, 128>}, {transform_indices = @transform_3, window_bounds = array<i64: 8, 8, 32>}, {transform_indices = @transform_4, window_bounds = array<i64: 8, 32>}, {transform_indices = @transform_5, window_bounds = array<i64: 8, 32>}]} {
    %c0_i32 = arith.constant 0 : i32
    %0 = arith.cmpi eq, %arg1, %c0_i32 : i32
    %1 = arith.extui %0 : i1 to i32
    %c0_i32_0 = arith.constant 0 : i32
    %2 = arith.cmpi ne, %1, %c0_i32_0 : i32
    scf.if %2 {
      %cst_140 = arith.constant 0.000000e+00 : f32
      %289 = vector.broadcast %cst_140 : f32 to vector<8x32xf32>
      %c0_141 = arith.constant 0 : index
      %c0_142 = arith.constant 0 : index
      %290 = vector.load %arg8[%c0_141, %c0_142] : memref<8x32xf32, #tpu.memory_space<vmem>>, vector<8x32xf32>
      tpu.vector_store %arg8[%c0_141, %c0_142], %289 {strides = array<i32>} : memref<8x32xf32, #tpu.memory_space<vmem>>, vector<8x32xf32>,
      %cst_143 = arith.constant 0.000000e+00 : f32
      %291 = vector.broadcast %cst_143 : f32 to vector<8x32xf32>
      %c0_144 = arith.constant 0 : index
      %c0_145 = arith.constant 0 : index
      %292 = vector.load %arg9[%c0_144, %c0_145] : memref<8x32xf32, #tpu.memory_space<vmem>>, vector<8x32xf32>
      tpu.vector_store %arg9[%c0_144, %c0_145], %291 {strides = array<i32>} : memref<8x32xf32, #tpu.memory_space<vmem>>, vector<8x32xf32>,
    } else {
    }
    %c0 = arith.constant 0 : index
    %c0_1 = arith.constant 0 : index
    %3 = vector.load %arg3[%c0, %c0_1] : memref<128x128xf32, #tpu.memory_space<vmem>>, vector<128x128xf32>
    %c0_2 = arith.constant 0 : index
    %c0_3 = arith.constant 0 : index
    %4 = vector.load %arg4[%c0_2, %c0_3] : memref<32x128xf32, #tpu.memory_space<vmem>>, vector<32x128xf32>
    %c0_4 = arith.constant 0 : index
    %c0_5 = arith.constant 0 : index
    %5 = vector.load %arg8[%c0_4, %c0_5] : memref<8x32xf32, #tpu.memory_space<vmem>>, vector<8x32xf32>
    %c0_6 = arith.constant 0 : index
    %c0_7 = arith.constant 0 : index
    %6 = vector.load %arg9[%c0_6, %c0_7] : memref<8x32xf32, #tpu.memory_space<vmem>>, vector<8x32xf32>
    %c0_8 = arith.constant 0 : index
    %c0_9 = arith.constant 0 : index
    %c0_10 = arith.constant 0 : index
    %7 = vector.load %arg2[%c0_8, %c0_9, %c0_10] : memref<8x8x128xf32, #tpu.memory_space<vmem>>, vector<1x8x128xf32>
    %8 = vector.shape_cast %7 : vector<1x8x128xf32> to vector<8x128xf32>
    %cst = arith.constant dense<0.000000e+00> : vector<8x128xf32>
    %9 = tpu.matmul %8, %3, %cst {dimension_numbers = #tpu.dot_dimension_numbers<[1], [0], [0], [1], [0, 0, 1, 1], [], []>} : vector<8x128xf32>, vector<128x128xf32>, vector<8x128xf32> -> vector<8x128xf32>
    %cst_11 = arith.constant dense<0.000000e+00> : vector<8x128xf32>
    %10 = tpu.matmul %5, %4, %cst_11 {dimension_numbers = #tpu.dot_dimension_numbers<[1], [0], [0], [1], [0, 0, 1, 1], [], []>} : vector<8x32xf32>, vector<32x128xf32>, vector<8x128xf32> -> vector<8x128xf32>
    %11 = arith.addf %9, %10 : vector<8x128xf32>
    %12 = math.tanh %11 : vector<8x128xf32>
    %13 = vector.extract_strided_slice %12 {offsets = [0, 0], sizes = [8, 32], strides = [1, 1]} : vector<8x128xf32> to vector<8x32xf32>
    %cst_12 = arith.constant 5.000000e-01 : f32
    %14 = vector.broadcast %cst_12 : f32 to vector<8x32xf32>
    %15 = arith.mulf %14, %13 : vector<8x32xf32>
    %cst_13 = arith.constant 5.000000e-01 : f32
    %16 = vector.broadcast %cst_13 : f32 to vector<8x32xf32>
    %17 = arith.addf %15, %16 : vector<8x32xf32>
    %18 = vector.extract_strided_slice %12 {offsets = [0, 32], sizes = [8, 32], strides = [1, 1]} : vector<8x128xf32> to vector<8x32xf32>
    %cst_14 = arith.constant 5.000000e-01 : f32
    %19 = vector.broadcast %cst_14 : f32 to vector<8x32xf32>
    %20 = arith.mulf %19, %18 : vector<8x32xf32>
    %cst_15 = arith.constant 5.000000e-01 : f32
    %21 = vector.broadcast %cst_15 : f32 to vector<8x32xf32>
    %22 = arith.addf %20, %21 : vector<8x32xf32>
    %23 = vector.extract_strided_slice %12 {offsets = [0, 64], sizes = [8, 32], strides = [1, 1]} : vector<8x128xf32> to vector<8x32xf32>
    %24 = vector.extract_strided_slice %12 {offsets = [0, 96], sizes = [8, 32], strides = [1, 1]} : vector<8x128xf32> to vector<8x32xf32>
    %cst_16 = arith.constant 5.000000e-01 : f32
    %25 = vector.broadcast %cst_16 : f32 to vector<8x32xf32>
    %26 = arith.mulf %25, %24 : vector<8x32xf32>
    %cst_17 = arith.constant 5.000000e-01 : f32
    %27 = vector.broadcast %cst_17 : f32 to vector<8x32xf32>
    %28 = arith.addf %26, %27 : vector<8x32xf32>
    %29 = arith.mulf %17, %6 : vector<8x32xf32>
    %30 = arith.mulf %22, %23 : vector<8x32xf32>
    %31 = arith.addf %29, %30 : vector<8x32xf32>
    %32 = math.tanh %31 : vector<8x32xf32>
    %33 = arith.mulf %28, %32 : vector<8x32xf32>
    %c0_18 = arith.constant 0 : index
    %c0_19 = arith.constant 0 : index
    %c0_20 = arith.constant 0 : index
    %34 = vector.load %arg5[%c0_18, %c0_19, %c0_20] : memref<8x8x32xf32, #tpu.memory_space<vmem>>, vector<1x8x32xf32>
    %35 = vector.shape_cast %34 : vector<1x8x32xf32> to vector<8x32xf32>
    %36 = vector.shape_cast %33 : vector<8x32xf32> to vector<1x8x32xf32>
    tpu.vector_store %arg5[%c0_18, %c0_19, %c0_20], %36 {strides = array<i32>} : memref<8x8x32xf32, #tpu.memory_space<vmem>>, vector<1x8x32xf32>,
    %c8_i32 = arith.constant 8 : i32
    %37 = arith.muli %arg1, %c8_i32 : i32
    %c0_i32_21 = arith.constant 0 : i32
    %38 = arith.addi %37, %c0_i32_21 : i32
    %c7_i32 = arith.constant 7 : i32
    %39 = arith.cmpi eq, %38, %c7_i32 : i32
    %40 = arith.extui %39 : i1 to i32
    %c0_i32_22 = arith.constant 0 : i32
    %41 = arith.cmpi ne, %40, %c0_i32_22 : i32
    scf.if %41 {
      %c0_140 = arith.constant 0 : index
      %c0_141 = arith.constant 0 : index
      %289 = vector.load %arg6[%c0_140, %c0_141] : memref<8x32xf32, #tpu.memory_space<vmem>>, vector<8x32xf32>
      tpu.vector_store %arg6[%c0_140, %c0_141], %33 {strides = array<i32>} : memref<8x32xf32, #tpu.memory_space<vmem>>, vector<8x32xf32>,
      %c0_142 = arith.constant 0 : index
      %c0_143 = arith.constant 0 : index
      %290 = vector.load %arg7[%c0_142, %c0_143] : memref<8x32xf32, #tpu.memory_space<vmem>>, vector<8x32xf32>
      tpu.vector_store %arg7[%c0_142, %c0_143], %31 {strides = array<i32>} : memref<8x32xf32, #tpu.memory_space<vmem>>, vector<8x32xf32>,
    } else {
    }
    %c1 = arith.constant 1 : index
    %c0_23 = arith.constant 0 : index
    %c0_24 = arith.constant 0 : index
    %42 = vector.load %arg2[%c1, %c0_23, %c0_24] : memref<8x8x128xf32, #tpu.memory_space<vmem>>, vector<1x8x128xf32>
    %43 = vector.shape_cast %42 : vector<1x8x128xf32> to vector<8x128xf32>
    %cst_25 = arith.constant dense<0.000000e+00> : vector<8x128xf32>
    %44 = tpu.matmul %43, %3, %cst_25 {dimension_numbers = #tpu.dot_dimension_numbers<[1], [0], [0], [1], [0, 0, 1, 1], [], []>} : vector<8x128xf32>, vector<128x128xf32>, vector<8x128xf32> -> vector<8x128xf32>
    %cst_26 = arith.constant dense<0.000000e+00> : vector<8x128xf32>
    %45 = tpu.matmul %33, %4, %cst_26 {dimension_numbers = #tpu.dot_dimension_numbers<[1], [0], [0], [1], [0, 0, 1, 1], [], []>} : vector<8x32xf32>, vector<32x128xf32>, vector<8x128xf32> -> vector<8x128xf32>
    %46 = arith.addf %44, %45 : vector<8x128xf32>
    %47 = math.tanh %46 : vector<8x128xf32>
    %48 = vector.extract_strided_slice %47 {offsets = [0, 0], sizes = [8, 32], strides = [1, 1]} : vector<8x128xf32> to vector<8x32xf32>
    %cst_27 = arith.constant 5.000000e-01 : f32
    %49 = vector.broadcast %cst_27 : f32 to vector<8x32xf32>
    %50 = arith.mulf %49, %48 : vector<8x32xf32>
    %cst_28 = arith.constant 5.000000e-01 : f32
    %51 = vector.broadcast %cst_28 : f32 to vector<8x32xf32>
    %52 = arith.addf %50, %51 : vector<8x32xf32>
    %53 = vector.extract_strided_slice %47 {offsets = [0, 32], sizes = [8, 32], strides = [1, 1]} : vector<8x128xf32> to vector<8x32xf32>
    %cst_29 = arith.constant 5.000000e-01 : f32
    %54 = vector.broadcast %cst_29 : f32 to vector<8x32xf32>
    %55 = arith.mulf %54, %53 : vector<8x32xf32>
    %cst_30 = arith.constant 5.000000e-01 : f32
    %56 = vector.broadcast %cst_30 : f32 to vector<8x32xf32>
    %57 = arith.addf %55, %56 : vector<8x32xf32>
    %58 = vector.extract_strided_slice %47 {offsets = [0, 64], sizes = [8, 32], strides = [1, 1]} : vector<8x128xf32> to vector<8x32xf32>
    %59 = vector.extract_strided_slice %47 {offsets = [0, 96], sizes = [8, 32], strides = [1, 1]} : vector<8x128xf32> to vector<8x32xf32>
    %cst_31 = arith.constant 5.000000e-01 : f32
    %60 = vector.broadcast %cst_31 : f32 to vector<8x32xf32>
    %61 = arith.mulf %60, %59 : vector<8x32xf32>
    %cst_32 = arith.constant 5.000000e-01 : f32
    %62 = vector.broadcast %cst_32 : f32 to vector<8x32xf32>
    %63 = arith.addf %61, %62 : vector<8x32xf32>
    %64 = arith.mulf %52, %31 : vector<8x32xf32>
    %65 = arith.mulf %57, %58 : vector<8x32xf32>
    %66 = arith.addf %64, %65 : vector<8x32xf32>
    %67 = math.tanh %66 : vector<8x32xf32>
    %68 = arith.mulf %63, %67 : vector<8x32xf32>
    %c1_33 = arith.constant 1 : index
    %c0_34 = arith.constant 0 : index
    %c0_35 = arith.constant 0 : index
    %69 = vector.load %arg5[%c1_33, %c0_34, %c0_35] : memref<8x8x32xf32, #tpu.memory_space<vmem>>, vector<1x8x32xf32>
    %70 = vector.shape_cast %69 : vector<1x8x32xf32> to vector<8x32xf32>
    %71 = vector.shape_cast %68 : vector<8x32xf32> to vector<1x8x32xf32>
    tpu.vector_store %arg5[%c1_33, %c0_34, %c0_35], %71 {strides = array<i32>} : memref<8x8x32xf32, #tpu.memory_space<vmem>>, vector<1x8x32xf32>,
    %c8_i32_36 = arith.constant 8 : i32
    %72 = arith.muli %arg1, %c8_i32_36 : i32
    %c1_i32 = arith.constant 1 : i32
    %73 = arith.addi %72, %c1_i32 : i32
    %c7_i32_37 = arith.constant 7 : i32
    %74 = arith.cmpi eq, %73, %c7_i32_37 : i32
    %75 = arith.extui %74 : i1 to i32
    %c0_i32_38 = arith.constant 0 : i32
    %76 = arith.cmpi ne, %75, %c0_i32_38 : i32
    scf.if %76 {
      %c0_140 = arith.constant 0 : index
      %c0_141 = arith.constant 0 : index
      %289 = vector.load %arg6[%c0_140, %c0_141] : memref<8x32xf32, #tpu.memory_space<vmem>>, vector<8x32xf32>
      tpu.vector_store %arg6[%c0_140, %c0_141], %68 {strides = array<i32>} : memref<8x32xf32, #tpu.memory_space<vmem>>, vector<8x32xf32>,
      %c0_142 = arith.constant 0 : index
      %c0_143 = arith.constant 0 : index
      %290 = vector.load %arg7[%c0_142, %c0_143] : memref<8x32xf32, #tpu.memory_space<vmem>>, vector<8x32xf32>
      tpu.vector_store %arg7[%c0_142, %c0_143], %66 {strides = array<i32>} : memref<8x32xf32, #tpu.memory_space<vmem>>, vector<8x32xf32>,
    } else {
    }
    %c2 = arith.constant 2 : index
    %c0_39 = arith.constant 0 : index
    %c0_40 = arith.constant 0 : index
    %77 = vector.load %arg2[%c2, %c0_39, %c0_40] : memref<8x8x128xf32, #tpu.memory_space<vmem>>, vector<1x8x128xf32>
    %78 = vector.shape_cast %77 : vector<1x8x128xf32> to vector<8x128xf32>
    %cst_41 = arith.constant dense<0.000000e+00> : vector<8x128xf32>
    %79 = tpu.matmul %78, %3, %cst_41 {dimension_numbers = #tpu.dot_dimension_numbers<[1], [0], [0], [1], [0, 0, 1, 1], [], []>} : vector<8x128xf32>, vector<128x128xf32>, vector<8x128xf32> -> vector<8x128xf32>
    %cst_42 = arith.constant dense<0.000000e+00> : vector<8x128xf32>
    %80 = tpu.matmul %68, %4, %cst_42 {dimension_numbers = #tpu.dot_dimension_numbers<[1], [0], [0], [1], [0, 0, 1, 1], [], []>} : vector<8x32xf32>, vector<32x128xf32>, vector<8x128xf32> -> vector<8x128xf32>
    %81 = arith.addf %79, %80 : vector<8x128xf32>
    %82 = math.tanh %81 : vector<8x128xf32>
    %83 = vector.extract_strided_slice %82 {offsets = [0, 0], sizes = [8, 32], strides = [1, 1]} : vector<8x128xf32> to vector<8x32xf32>
    %cst_43 = arith.constant 5.000000e-01 : f32
    %84 = vector.broadcast %cst_43 : f32 to vector<8x32xf32>
    %85 = arith.mulf %84, %83 : vector<8x32xf32>
    %cst_44 = arith.constant 5.000000e-01 : f32
    %86 = vector.broadcast %cst_44 : f32 to vector<8x32xf32>
    %87 = arith.addf %85, %86 : vector<8x32xf32>
    %88 = vector.extract_strided_slice %82 {offsets = [0, 32], sizes = [8, 32], strides = [1, 1]} : vector<8x128xf32> to vector<8x32xf32>
    %cst_45 = arith.constant 5.000000e-01 : f32
    %89 = vector.broadcast %cst_45 : f32 to vector<8x32xf32>
    %90 = arith.mulf %89, %88 : vector<8x32xf32>
    %cst_46 = arith.constant 5.000000e-01 : f32
    %91 = vector.broadcast %cst_46 : f32 to vector<8x32xf32>
    %92 = arith.addf %90, %91 : vector<8x32xf32>
    %93 = vector.extract_strided_slice %82 {offsets = [0, 64], sizes = [8, 32], strides = [1, 1]} : vector<8x128xf32> to vector<8x32xf32>
    %94 = vector.extract_strided_slice %82 {offsets = [0, 96], sizes = [8, 32], strides = [1, 1]} : vector<8x128xf32> to vector<8x32xf32>
    %cst_47 = arith.constant 5.000000e-01 : f32
    %95 = vector.broadcast %cst_47 : f32 to vector<8x32xf32>
    %96 = arith.mulf %95, %94 : vector<8x32xf32>
    %cst_48 = arith.constant 5.000000e-01 : f32
    %97 = vector.broadcast %cst_48 : f32 to vector<8x32xf32>
    %98 = arith.addf %96, %97 : vector<8x32xf32>
    %99 = arith.mulf %87, %66 : vector<8x32xf32>
    %100 = arith.mulf %92, %93 : vector<8x32xf32>
    %101 = arith.addf %99, %100 : vector<8x32xf32>
    %102 = math.tanh %101 : vector<8x32xf32>
    %103 = arith.mulf %98, %102 : vector<8x32xf32>
    %c2_49 = arith.constant 2 : index
    %c0_50 = arith.constant 0 : index
    %c0_51 = arith.constant 0 : index
    %104 = vector.load %arg5[%c2_49, %c0_50, %c0_51] : memref<8x8x32xf32, #tpu.memory_space<vmem>>, vector<1x8x32xf32>
    %105 = vector.shape_cast %104 : vector<1x8x32xf32> to vector<8x32xf32>
    %106 = vector.shape_cast %103 : vector<8x32xf32> to vector<1x8x32xf32>
    tpu.vector_store %arg5[%c2_49, %c0_50, %c0_51], %106 {strides = array<i32>} : memref<8x8x32xf32, #tpu.memory_space<vmem>>, vector<1x8x32xf32>,
    %c8_i32_52 = arith.constant 8 : i32
    %107 = arith.muli %arg1, %c8_i32_52 : i32
    %c2_i32 = arith.constant 2 : i32
    %108 = arith.addi %107, %c2_i32 : i32
    %c7_i32_53 = arith.constant 7 : i32
    %109 = arith.cmpi eq, %108, %c7_i32_53 : i32
    %110 = arith.extui %109 : i1 to i32
    %c0_i32_54 = arith.constant 0 : i32
    %111 = arith.cmpi ne, %110, %c0_i32_54 : i32
    scf.if %111 {
      %c0_140 = arith.constant 0 : index
      %c0_141 = arith.constant 0 : index
      %289 = vector.load %arg6[%c0_140, %c0_141] : memref<8x32xf32, #tpu.memory_space<vmem>>, vector<8x32xf32>
      tpu.vector_store %arg6[%c0_140, %c0_141], %103 {strides = array<i32>} : memref<8x32xf32, #tpu.memory_space<vmem>>, vector<8x32xf32>,
      %c0_142 = arith.constant 0 : index
      %c0_143 = arith.constant 0 : index
      %290 = vector.load %arg7[%c0_142, %c0_143] : memref<8x32xf32, #tpu.memory_space<vmem>>, vector<8x32xf32>
      tpu.vector_store %arg7[%c0_142, %c0_143], %101 {strides = array<i32>} : memref<8x32xf32, #tpu.memory_space<vmem>>, vector<8x32xf32>,
    } else {
    }
    %c3 = arith.constant 3 : index
    %c0_55 = arith.constant 0 : index
    %c0_56 = arith.constant 0 : index
    %112 = vector.load %arg2[%c3, %c0_55, %c0_56] : memref<8x8x128xf32, #tpu.memory_space<vmem>>, vector<1x8x128xf32>
    %113 = vector.shape_cast %112 : vector<1x8x128xf32> to vector<8x128xf32>
    %cst_57 = arith.constant dense<0.000000e+00> : vector<8x128xf32>
    %114 = tpu.matmul %113, %3, %cst_57 {dimension_numbers = #tpu.dot_dimension_numbers<[1], [0], [0], [1], [0, 0, 1, 1], [], []>} : vector<8x128xf32>, vector<128x128xf32>, vector<8x128xf32> -> vector<8x128xf32>
    %cst_58 = arith.constant dense<0.000000e+00> : vector<8x128xf32>
    %115 = tpu.matmul %103, %4, %cst_58 {dimension_numbers = #tpu.dot_dimension_numbers<[1], [0], [0], [1], [0, 0, 1, 1], [], []>} : vector<8x32xf32>, vector<32x128xf32>, vector<8x128xf32> -> vector<8x128xf32>
    %116 = arith.addf %114, %115 : vector<8x128xf32>
    %117 = math.tanh %116 : vector<8x128xf32>
    %118 = vector.extract_strided_slice %117 {offsets = [0, 0], sizes = [8, 32], strides = [1, 1]} : vector<8x128xf32> to vector<8x32xf32>
    %cst_59 = arith.constant 5.000000e-01 : f32
    %119 = vector.broadcast %cst_59 : f32 to vector<8x32xf32>
    %120 = arith.mulf %119, %118 : vector<8x32xf32>
    %cst_60 = arith.constant 5.000000e-01 : f32
    %121 = vector.broadcast %cst_60 : f32 to vector<8x32xf32>
    %122 = arith.addf %120, %121 : vector<8x32xf32>
    %123 = vector.extract_strided_slice %117 {offsets = [0, 32], sizes = [8, 32], strides = [1, 1]} : vector<8x128xf32> to vector<8x32xf32>
    %cst_61 = arith.constant 5.000000e-01 : f32
    %124 = vector.broadcast %cst_61 : f32 to vector<8x32xf32>
    %125 = arith.mulf %124, %123 : vector<8x32xf32>
    %cst_62 = arith.constant 5.000000e-01 : f32
    %126 = vector.broadcast %cst_62 : f32 to vector<8x32xf32>
    %127 = arith.addf %125, %126 : vector<8x32xf32>
    %128 = vector.extract_strided_slice %117 {offsets = [0, 64], sizes = [8, 32], strides = [1, 1]} : vector<8x128xf32> to vector<8x32xf32>
    %129 = vector.extract_strided_slice %117 {offsets = [0, 96], sizes = [8, 32], strides = [1, 1]} : vector<8x128xf32> to vector<8x32xf32>
    %cst_63 = arith.constant 5.000000e-01 : f32
    %130 = vector.broadcast %cst_63 : f32 to vector<8x32xf32>
    %131 = arith.mulf %130, %129 : vector<8x32xf32>
    %cst_64 = arith.constant 5.000000e-01 : f32
    %132 = vector.broadcast %cst_64 : f32 to vector<8x32xf32>
    %133 = arith.addf %131, %132 : vector<8x32xf32>
    %134 = arith.mulf %122, %101 : vector<8x32xf32>
    %135 = arith.mulf %127, %128 : vector<8x32xf32>
    %136 = arith.addf %134, %135 : vector<8x32xf32>
    %137 = math.tanh %136 : vector<8x32xf32>
    %138 = arith.mulf %133, %137 : vector<8x32xf32>
    %c3_65 = arith.constant 3 : index
    %c0_66 = arith.constant 0 : index
    %c0_67 = arith.constant 0 : index
    %139 = vector.load %arg5[%c3_65, %c0_66, %c0_67] : memref<8x8x32xf32, #tpu.memory_space<vmem>>, vector<1x8x32xf32>
    %140 = vector.shape_cast %139 : vector<1x8x32xf32> to vector<8x32xf32>
    %141 = vector.shape_cast %138 : vector<8x32xf32> to vector<1x8x32xf32>
    tpu.vector_store %arg5[%c3_65, %c0_66, %c0_67], %141 {strides = array<i32>} : memref<8x8x32xf32, #tpu.memory_space<vmem>>, vector<1x8x32xf32>,
    %c8_i32_68 = arith.constant 8 : i32
    %142 = arith.muli %arg1, %c8_i32_68 : i32
    %c3_i32 = arith.constant 3 : i32
    %143 = arith.addi %142, %c3_i32 : i32
    %c7_i32_69 = arith.constant 7 : i32
    %144 = arith.cmpi eq, %143, %c7_i32_69 : i32
    %145 = arith.extui %144 : i1 to i32
    %c0_i32_70 = arith.constant 0 : i32
    %146 = arith.cmpi ne, %145, %c0_i32_70 : i32
    scf.if %146 {
      %c0_140 = arith.constant 0 : index
      %c0_141 = arith.constant 0 : index
      %289 = vector.load %arg6[%c0_140, %c0_141] : memref<8x32xf32, #tpu.memory_space<vmem>>, vector<8x32xf32>
      tpu.vector_store %arg6[%c0_140, %c0_141], %138 {strides = array<i32>} : memref<8x32xf32, #tpu.memory_space<vmem>>, vector<8x32xf32>,
      %c0_142 = arith.constant 0 : index
      %c0_143 = arith.constant 0 : index
      %290 = vector.load %arg7[%c0_142, %c0_143] : memref<8x32xf32, #tpu.memory_space<vmem>>, vector<8x32xf32>
      tpu.vector_store %arg7[%c0_142, %c0_143], %136 {strides = array<i32>} : memref<8x32xf32, #tpu.memory_space<vmem>>, vector<8x32xf32>,
    } else {
    }
    %c4 = arith.constant 4 : index
    %c0_71 = arith.constant 0 : index
    %c0_72 = arith.constant 0 : index
    %147 = vector.load %arg2[%c4, %c0_71, %c0_72] : memref<8x8x128xf32, #tpu.memory_space<vmem>>, vector<1x8x128xf32>
    %148 = vector.shape_cast %147 : vector<1x8x128xf32> to vector<8x128xf32>
    %cst_73 = arith.constant dense<0.000000e+00> : vector<8x128xf32>
    %149 = tpu.matmul %148, %3, %cst_73 {dimension_numbers = #tpu.dot_dimension_numbers<[1], [0], [0], [1], [0, 0, 1, 1], [], []>} : vector<8x128xf32>, vector<128x128xf32>, vector<8x128xf32> -> vector<8x128xf32>
    %cst_74 = arith.constant dense<0.000000e+00> : vector<8x128xf32>
    %150 = tpu.matmul %138, %4, %cst_74 {dimension_numbers = #tpu.dot_dimension_numbers<[1], [0], [0], [1], [0, 0, 1, 1], [], []>} : vector<8x32xf32>, vector<32x128xf32>, vector<8x128xf32> -> vector<8x128xf32>
    %151 = arith.addf %149, %150 : vector<8x128xf32>
    %152 = math.tanh %151 : vector<8x128xf32>
    %153 = vector.extract_strided_slice %152 {offsets = [0, 0], sizes = [8, 32], strides = [1, 1]} : vector<8x128xf32> to vector<8x32xf32>
    %cst_75 = arith.constant 5.000000e-01 : f32
    %154 = vector.broadcast %cst_75 : f32 to vector<8x32xf32>
    %155 = arith.mulf %154, %153 : vector<8x32xf32>
    %cst_76 = arith.constant 5.000000e-01 : f32
    %156 = vector.broadcast %cst_76 : f32 to vector<8x32xf32>
    %157 = arith.addf %155, %156 : vector<8x32xf32>
    %158 = vector.extract_strided_slice %152 {offsets = [0, 32], sizes = [8, 32], strides = [1, 1]} : vector<8x128xf32> to vector<8x32xf32>
    %cst_77 = arith.constant 5.000000e-01 : f32
    %159 = vector.broadcast %cst_77 : f32 to vector<8x32xf32>
    %160 = arith.mulf %159, %158 : vector<8x32xf32>
    %cst_78 = arith.constant 5.000000e-01 : f32
    %161 = vector.broadcast %cst_78 : f32 to vector<8x32xf32>
    %162 = arith.addf %160, %161 : vector<8x32xf32>
    %163 = vector.extract_strided_slice %152 {offsets = [0, 64], sizes = [8, 32], strides = [1, 1]} : vector<8x128xf32> to vector<8x32xf32>
    %164 = vector.extract_strided_slice %152 {offsets = [0, 96], sizes = [8, 32], strides = [1, 1]} : vector<8x128xf32> to vector<8x32xf32>
    %cst_79 = arith.constant 5.000000e-01 : f32
    %165 = vector.broadcast %cst_79 : f32 to vector<8x32xf32>
    %166 = arith.mulf %165, %164 : vector<8x32xf32>
    %cst_80 = arith.constant 5.000000e-01 : f32
    %167 = vector.broadcast %cst_80 : f32 to vector<8x32xf32>
    %168 = arith.addf %166, %167 : vector<8x32xf32>
    %169 = arith.mulf %157, %136 : vector<8x32xf32>
    %170 = arith.mulf %162, %163 : vector<8x32xf32>
    %171 = arith.addf %169, %170 : vector<8x32xf32>
    %172 = math.tanh %171 : vector<8x32xf32>
    %173 = arith.mulf %168, %172 : vector<8x32xf32>
    %c4_81 = arith.constant 4 : index
    %c0_82 = arith.constant 0 : index
    %c0_83 = arith.constant 0 : index
    %174 = vector.load %arg5[%c4_81, %c0_82, %c0_83] : memref<8x8x32xf32, #tpu.memory_space<vmem>>, vector<1x8x32xf32>
    %175 = vector.shape_cast %174 : vector<1x8x32xf32> to vector<8x32xf32>
    %176 = vector.shape_cast %173 : vector<8x32xf32> to vector<1x8x32xf32>
    tpu.vector_store %arg5[%c4_81, %c0_82, %c0_83], %176 {strides = array<i32>} : memref<8x8x32xf32, #tpu.memory_space<vmem>>, vector<1x8x32xf32>,
    %c8_i32_84 = arith.constant 8 : i32
    %177 = arith.muli %arg1, %c8_i32_84 : i32
    %c4_i32 = arith.constant 4 : i32
    %178 = arith.addi %177, %c4_i32 : i32
    %c7_i32_85 = arith.constant 7 : i32
    %179 = arith.cmpi eq, %178, %c7_i32_85 : i32
    %180 = arith.extui %179 : i1 to i32
    %c0_i32_86 = arith.constant 0 : i32
    %181 = arith.cmpi ne, %180, %c0_i32_86 : i32
    scf.if %181 {
      %c0_140 = arith.constant 0 : index
      %c0_141 = arith.constant 0 : index
      %289 = vector.load %arg6[%c0_140, %c0_141] : memref<8x32xf32, #tpu.memory_space<vmem>>, vector<8x32xf32>
      tpu.vector_store %arg6[%c0_140, %c0_141], %173 {strides = array<i32>} : memref<8x32xf32, #tpu.memory_space<vmem>>, vector<8x32xf32>,
      %c0_142 = arith.constant 0 : index
      %c0_143 = arith.constant 0 : index
      %290 = vector.load %arg7[%c0_142, %c0_143] : memref<8x32xf32, #tpu.memory_space<vmem>>, vector<8x32xf32>
      tpu.vector_store %arg7[%c0_142, %c0_143], %171 {strides = array<i32>} : memref<8x32xf32, #tpu.memory_space<vmem>>, vector<8x32xf32>,
    } else {
    }
    %c5 = arith.constant 5 : index
    %c0_87 = arith.constant 0 : index
    %c0_88 = arith.constant 0 : index
    %182 = vector.load %arg2[%c5, %c0_87, %c0_88] : memref<8x8x128xf32, #tpu.memory_space<vmem>>, vector<1x8x128xf32>
    %183 = vector.shape_cast %182 : vector<1x8x128xf32> to vector<8x128xf32>
    %cst_89 = arith.constant dense<0.000000e+00> : vector<8x128xf32>
    %184 = tpu.matmul %183, %3, %cst_89 {dimension_numbers = #tpu.dot_dimension_numbers<[1], [0], [0], [1], [0, 0, 1, 1], [], []>} : vector<8x128xf32>, vector<128x128xf32>, vector<8x128xf32> -> vector<8x128xf32>
    %cst_90 = arith.constant dense<0.000000e+00> : vector<8x128xf32>
    %185 = tpu.matmul %173, %4, %cst_90 {dimension_numbers = #tpu.dot_dimension_numbers<[1], [0], [0], [1], [0, 0, 1, 1], [], []>} : vector<8x32xf32>, vector<32x128xf32>, vector<8x128xf32> -> vector<8x128xf32>
    %186 = arith.addf %184, %185 : vector<8x128xf32>
    %187 = math.tanh %186 : vector<8x128xf32>
    %188 = vector.extract_strided_slice %187 {offsets = [0, 0], sizes = [8, 32], strides = [1, 1]} : vector<8x128xf32> to vector<8x32xf32>
    %cst_91 = arith.constant 5.000000e-01 : f32
    %189 = vector.broadcast %cst_91 : f32 to vector<8x32xf32>
    %190 = arith.mulf %189, %188 : vector<8x32xf32>
    %cst_92 = arith.constant 5.000000e-01 : f32
    %191 = vector.broadcast %cst_92 : f32 to vector<8x32xf32>
    %192 = arith.addf %190, %191 : vector<8x32xf32>
    %193 = vector.extract_strided_slice %187 {offsets = [0, 32], sizes = [8, 32], strides = [1, 1]} : vector<8x128xf32> to vector<8x32xf32>
    %cst_93 = arith.constant 5.000000e-01 : f32
    %194 = vector.broadcast %cst_93 : f32 to vector<8x32xf32>
    %195 = arith.mulf %194, %193 : vector<8x32xf32>
    %cst_94 = arith.constant 5.000000e-01 : f32
    %196 = vector.broadcast %cst_94 : f32 to vector<8x32xf32>
    %197 = arith.addf %195, %196 : vector<8x32xf32>
    %198 = vector.extract_strided_slice %187 {offsets = [0, 64], sizes = [8, 32], strides = [1, 1]} : vector<8x128xf32> to vector<8x32xf32>
    %199 = vector.extract_strided_slice %187 {offsets = [0, 96], sizes = [8, 32], strides = [1, 1]} : vector<8x128xf32> to vector<8x32xf32>
    %cst_95 = arith.constant 5.000000e-01 : f32
    %200 = vector.broadcast %cst_95 : f32 to vector<8x32xf32>
    %201 = arith.mulf %200, %199 : vector<8x32xf32>
    %cst_96 = arith.constant 5.000000e-01 : f32
    %202 = vector.broadcast %cst_96 : f32 to vector<8x32xf32>
    %203 = arith.addf %201, %202 : vector<8x32xf32>
    %204 = arith.mulf %192, %171 : vector<8x32xf32>
    %205 = arith.mulf %197, %198 : vector<8x32xf32>
    %206 = arith.addf %204, %205 : vector<8x32xf32>
    %207 = math.tanh %206 : vector<8x32xf32>
    %208 = arith.mulf %203, %207 : vector<8x32xf32>
    %c5_97 = arith.constant 5 : index
    %c0_98 = arith.constant 0 : index
    %c0_99 = arith.constant 0 : index
    %209 = vector.load %arg5[%c5_97, %c0_98, %c0_99] : memref<8x8x32xf32, #tpu.memory_space<vmem>>, vector<1x8x32xf32>
    %210 = vector.shape_cast %209 : vector<1x8x32xf32> to vector<8x32xf32>
    %211 = vector.shape_cast %208 : vector<8x32xf32> to vector<1x8x32xf32>
    tpu.vector_store %arg5[%c5_97, %c0_98, %c0_99], %211 {strides = array<i32>} : memref<8x8x32xf32, #tpu.memory_space<vmem>>, vector<1x8x32xf32>,
    %c8_i32_100 = arith.constant 8 : i32
    %212 = arith.muli %arg1, %c8_i32_100 : i32
    %c5_i32 = arith.constant 5 : i32
    %213 = arith.addi %212, %c5_i32 : i32
    %c7_i32_101 = arith.constant 7 : i32
    %214 = arith.cmpi eq, %213, %c7_i32_101 : i32
    %215 = arith.extui %214 : i1 to i32
    %c0_i32_102 = arith.constant 0 : i32
    %216 = arith.cmpi ne, %215, %c0_i32_102 : i32
    scf.if %216 {
      %c0_140 = arith.constant 0 : index
      %c0_141 = arith.constant 0 : index
      %289 = vector.load %arg6[%c0_140, %c0_141] : memref<8x32xf32, #tpu.memory_space<vmem>>, vector<8x32xf32>
      tpu.vector_store %arg6[%c0_140, %c0_141], %208 {strides = array<i32>} : memref<8x32xf32, #tpu.memory_space<vmem>>, vector<8x32xf32>,
      %c0_142 = arith.constant 0 : index
      %c0_143 = arith.constant 0 : index
      %290 = vector.load %arg7[%c0_142, %c0_143] : memref<8x32xf32, #tpu.memory_space<vmem>>, vector<8x32xf32>
      tpu.vector_store %arg7[%c0_142, %c0_143], %206 {strides = array<i32>} : memref<8x32xf32, #tpu.memory_space<vmem>>, vector<8x32xf32>,
    } else {
    }
    %c6 = arith.constant 6 : index
    %c0_103 = arith.constant 0 : index
    %c0_104 = arith.constant 0 : index
    %217 = vector.load %arg2[%c6, %c0_103, %c0_104] : memref<8x8x128xf32, #tpu.memory_space<vmem>>, vector<1x8x128xf32>
    %218 = vector.shape_cast %217 : vector<1x8x128xf32> to vector<8x128xf32>
    %cst_105 = arith.constant dense<0.000000e+00> : vector<8x128xf32>
    %219 = tpu.matmul %218, %3, %cst_105 {dimension_numbers = #tpu.dot_dimension_numbers<[1], [0], [0], [1], [0, 0, 1, 1], [], []>} : vector<8x128xf32>, vector<128x128xf32>, vector<8x128xf32> -> vector<8x128xf32>
    %cst_106 = arith.constant dense<0.000000e+00> : vector<8x128xf32>
    %220 = tpu.matmul %208, %4, %cst_106 {dimension_numbers = #tpu.dot_dimension_numbers<[1], [0], [0], [1], [0, 0, 1, 1], [], []>} : vector<8x32xf32>, vector<32x128xf32>, vector<8x128xf32> -> vector<8x128xf32>
    %221 = arith.addf %219, %220 : vector<8x128xf32>
    %222 = math.tanh %221 : vector<8x128xf32>
    %223 = vector.extract_strided_slice %222 {offsets = [0, 0], sizes = [8, 32], strides = [1, 1]} : vector<8x128xf32> to vector<8x32xf32>
    %cst_107 = arith.constant 5.000000e-01 : f32
    %224 = vector.broadcast %cst_107 : f32 to vector<8x32xf32>
    %225 = arith.mulf %224, %223 : vector<8x32xf32>
    %cst_108 = arith.constant 5.000000e-01 : f32
    %226 = vector.broadcast %cst_108 : f32 to vector<8x32xf32>
    %227 = arith.addf %225, %226 : vector<8x32xf32>
    %228 = vector.extract_strided_slice %222 {offsets = [0, 32], sizes = [8, 32], strides = [1, 1]} : vector<8x128xf32> to vector<8x32xf32>
    %cst_109 = arith.constant 5.000000e-01 : f32
    %229 = vector.broadcast %cst_109 : f32 to vector<8x32xf32>
    %230 = arith.mulf %229, %228 : vector<8x32xf32>
    %cst_110 = arith.constant 5.000000e-01 : f32
    %231 = vector.broadcast %cst_110 : f32 to vector<8x32xf32>
    %232 = arith.addf %230, %231 : vector<8x32xf32>
    %233 = vector.extract_strided_slice %222 {offsets = [0, 64], sizes = [8, 32], strides = [1, 1]} : vector<8x128xf32> to vector<8x32xf32>
    %234 = vector.extract_strided_slice %222 {offsets = [0, 96], sizes = [8, 32], strides = [1, 1]} : vector<8x128xf32> to vector<8x32xf32>
    %cst_111 = arith.constant 5.000000e-01 : f32
    %235 = vector.broadcast %cst_111 : f32 to vector<8x32xf32>
    %236 = arith.mulf %235, %234 : vector<8x32xf32>
    %cst_112 = arith.constant 5.000000e-01 : f32
    %237 = vector.broadcast %cst_112 : f32 to vector<8x32xf32>
    %238 = arith.addf %236, %237 : vector<8x32xf32>
    %239 = arith.mulf %227, %206 : vector<8x32xf32>
    %240 = arith.mulf %232, %233 : vector<8x32xf32>
    %241 = arith.addf %239, %240 : vector<8x32xf32>
    %242 = math.tanh %241 : vector<8x32xf32>
    %243 = arith.mulf %238, %242 : vector<8x32xf32>
    %c6_113 = arith.constant 6 : index
    %c0_114 = arith.constant 0 : index
    %c0_115 = arith.constant 0 : index
    %244 = vector.load %arg5[%c6_113, %c0_114, %c0_115] : memref<8x8x32xf32, #tpu.memory_space<vmem>>, vector<1x8x32xf32>
    %245 = vector.shape_cast %244 : vector<1x8x32xf32> to vector<8x32xf32>
    %246 = vector.shape_cast %243 : vector<8x32xf32> to vector<1x8x32xf32>
    tpu.vector_store %arg5[%c6_113, %c0_114, %c0_115], %246 {strides = array<i32>} : memref<8x8x32xf32, #tpu.memory_space<vmem>>, vector<1x8x32xf32>,
    %c8_i32_116 = arith.constant 8 : i32
    %247 = arith.muli %arg1, %c8_i32_116 : i32
    %c6_i32 = arith.constant 6 : i32
    %248 = arith.addi %247, %c6_i32 : i32
    %c7_i32_117 = arith.constant 7 : i32
    %249 = arith.cmpi eq, %248, %c7_i32_117 : i32
    %250 = arith.extui %249 : i1 to i32
    %c0_i32_118 = arith.constant 0 : i32
    %251 = arith.cmpi ne, %250, %c0_i32_118 : i32
    scf.if %251 {
      %c0_140 = arith.constant 0 : index
      %c0_141 = arith.constant 0 : index
      %289 = vector.load %arg6[%c0_140, %c0_141] : memref<8x32xf32, #tpu.memory_space<vmem>>, vector<8x32xf32>
      tpu.vector_store %arg6[%c0_140, %c0_141], %243 {strides = array<i32>} : memref<8x32xf32, #tpu.memory_space<vmem>>, vector<8x32xf32>,
      %c0_142 = arith.constant 0 : index
      %c0_143 = arith.constant 0 : index
      %290 = vector.load %arg7[%c0_142, %c0_143] : memref<8x32xf32, #tpu.memory_space<vmem>>, vector<8x32xf32>
      tpu.vector_store %arg7[%c0_142, %c0_143], %241 {strides = array<i32>} : memref<8x32xf32, #tpu.memory_space<vmem>>, vector<8x32xf32>,
    } else {
    }
    %c7 = arith.constant 7 : index
    %c0_119 = arith.constant 0 : index
    %c0_120 = arith.constant 0 : index
    %252 = vector.load %arg2[%c7, %c0_119, %c0_120] : memref<8x8x128xf32, #tpu.memory_space<vmem>>, vector<1x8x128xf32>
    %253 = vector.shape_cast %252 : vector<1x8x128xf32> to vector<8x128xf32>
    %cst_121 = arith.constant dense<0.000000e+00> : vector<8x128xf32>
    %254 = tpu.matmul %253, %3, %cst_121 {dimension_numbers = #tpu.dot_dimension_numbers<[1], [0], [0], [1], [0, 0, 1, 1], [], []>} : vector<8x128xf32>, vector<128x128xf32>, vector<8x128xf32> -> vector<8x128xf32>
    %cst_122 = arith.constant dense<0.000000e+00> : vector<8x128xf32>
    %255 = tpu.matmul %243, %4, %cst_122 {dimension_numbers = #tpu.dot_dimension_numbers<[1], [0], [0], [1], [0, 0, 1, 1], [], []>} : vector<8x32xf32>, vector<32x128xf32>, vector<8x128xf32> -> vector<8x128xf32>
    %256 = arith.addf %254, %255 : vector<8x128xf32>
    %257 = math.tanh %256 : vector<8x128xf32>
    %258 = vector.extract_strided_slice %257 {offsets = [0, 0], sizes = [8, 32], strides = [1, 1]} : vector<8x128xf32> to vector<8x32xf32>
    %cst_123 = arith.constant 5.000000e-01 : f32
    %259 = vector.broadcast %cst_123 : f32 to vector<8x32xf32>
    %260 = arith.mulf %259, %258 : vector<8x32xf32>
    %cst_124 = arith.constant 5.000000e-01 : f32
    %261 = vector.broadcast %cst_124 : f32 to vector<8x32xf32>
    %262 = arith.addf %260, %261 : vector<8x32xf32>
    %263 = vector.extract_strided_slice %257 {offsets = [0, 32], sizes = [8, 32], strides = [1, 1]} : vector<8x128xf32> to vector<8x32xf32>
    %cst_125 = arith.constant 5.000000e-01 : f32
    %264 = vector.broadcast %cst_125 : f32 to vector<8x32xf32>
    %265 = arith.mulf %264, %263 : vector<8x32xf32>
    %cst_126 = arith.constant 5.000000e-01 : f32
    %266 = vector.broadcast %cst_126 : f32 to vector<8x32xf32>
    %267 = arith.addf %265, %266 : vector<8x32xf32>
    %268 = vector.extract_strided_slice %257 {offsets = [0, 64], sizes = [8, 32], strides = [1, 1]} : vector<8x128xf32> to vector<8x32xf32>
    %269 = vector.extract_strided_slice %257 {offsets = [0, 96], sizes = [8, 32], strides = [1, 1]} : vector<8x128xf32> to vector<8x32xf32>
    %cst_127 = arith.constant 5.000000e-01 : f32
    %270 = vector.broadcast %cst_127 : f32 to vector<8x32xf32>
    %271 = arith.mulf %270, %269 : vector<8x32xf32>
    %cst_128 = arith.constant 5.000000e-01 : f32
    %272 = vector.broadcast %cst_128 : f32 to vector<8x32xf32>
    %273 = arith.addf %271, %272 : vector<8x32xf32>
    %274 = arith.mulf %262, %241 : vector<8x32xf32>
    %275 = arith.mulf %267, %268 : vector<8x32xf32>
    %276 = arith.addf %274, %275 : vector<8x32xf32>
    %277 = math.tanh %276 : vector<8x32xf32>
    %278 = arith.mulf %273, %277 : vector<8x32xf32>
    %c7_129 = arith.constant 7 : index
    %c0_130 = arith.constant 0 : index
    %c0_131 = arith.constant 0 : index
    %279 = vector.load %arg5[%c7_129, %c0_130, %c0_131] : memref<8x8x32xf32, #tpu.memory_space<vmem>>, vector<1x8x32xf32>
    %280 = vector.shape_cast %279 : vector<1x8x32xf32> to vector<8x32xf32>
    %281 = vector.shape_cast %278 : vector<8x32xf32> to vector<1x8x32xf32>
    tpu.vector_store %arg5[%c7_129, %c0_130, %c0_131], %281 {strides = array<i32>} : memref<8x8x32xf32, #tpu.memory_space<vmem>>, vector<1x8x32xf32>,
    %c8_i32_132 = arith.constant 8 : i32
    %282 = arith.muli %arg1, %c8_i32_132 : i32
    %c7_i32_133 = arith.constant 7 : i32
    %283 = arith.addi %282, %c7_i32_133 : i32
    %c7_i32_134 = arith.constant 7 : i32
    %284 = arith.cmpi eq, %283, %c7_i32_134 : i32
    %285 = arith.extui %284 : i1 to i32
    %c0_i32_135 = arith.constant 0 : i32
    %286 = arith.cmpi ne, %285, %c0_i32_135 : i32
    scf.if %286 {
      %c0_140 = arith.constant 0 : index
      %c0_141 = arith.constant 0 : index
      %289 = vector.load %arg6[%c0_140, %c0_141] : memref<8x32xf32, #tpu.memory_space<vmem>>, vector<8x32xf32>
      tpu.vector_store %arg6[%c0_140, %c0_141], %278 {strides = array<i32>} : memref<8x32xf32, #tpu.memory_space<vmem>>, vector<8x32xf32>,
      %c0_142 = arith.constant 0 : index
      %c0_143 = arith.constant 0 : index
      %290 = vector.load %arg7[%c0_142, %c0_143] : memref<8x32xf32, #tpu.memory_space<vmem>>, vector<8x32xf32>
      tpu.vector_store %arg7[%c0_142, %c0_143], %276 {strides = array<i32>} : memref<8x32xf32, #tpu.memory_space<vmem>>, vector<8x32xf32>,
    } else {
    }
    %c0_136 = arith.constant 0 : index
    %c0_137 = arith.constant 0 : index
    %287 = vector.load %arg8[%c0_136, %c0_137] : memref<8x32xf32, #tpu.memory_space<vmem>>, vector<8x32xf32>
    tpu.vector_store %arg8[%c0_136, %c0_137], %278 {strides = array<i32>} : memref<8x32xf32, #tpu.memory_space<vmem>>, vector<8x32xf32>,
    %c0_138 = arith.constant 0 : index
    %c0_139 = arith.constant 0 : index
    %288 = vector.load %arg9[%c0_138, %c0_139] : memref<8x32xf32, #tpu.memory_space<vmem>>, vector<8x32xf32>
    tpu.vector_store %arg9[%c0_138, %c0_139], %276 {strides = array<i32>} : memref<8x32xf32, #tpu.memory_space<vmem>>, vector<8x32xf32>,
    return
  }
  func.func @transform_0(%arg0: i32, %arg1: i32) -> (i32, i32, i32) {
    %c0_i32 = arith.constant 0 : i32
    %c0_i32_0 = arith.constant 0 : i32
    return %arg1, %arg0, %c0_i32 : i32, i32, i32
  }
  func.func @transform_1(%arg0: i32, %arg1: i32) -> (i32, i32) {
    %c0_i32 = arith.constant 0 : i32
    %c0_i32_0 = arith.constant 0 : i32
    %c0_i32_1 = arith.constant 0 : i32
    return %c0_i32, %c0_i32_0 : i32, i32
  }
  func.func @transform_2(%arg0: i32, %arg1: i32) -> (i32, i32) {
    %c0_i32 = arith.constant 0 : i32
    %c0_i32_0 = arith.constant 0 : i32
    %c0_i32_1 = arith.constant 0 : i32
    return %c0_i32, %c0_i32_0 : i32, i32
  }
  func.func @transform_3(%arg0: i32, %arg1: i32) -> (i32, i32, i32) {
    %c0_i32 = arith.constant 0 : i32
    %c0_i32_0 = arith.constant 0 : i32
    return %arg1, %arg0, %c0_i32 : i32, i32, i32
  }
  func.func @transform_4(%arg0: i32, %arg1: i32) -> (i32, i32) {
    %c0_i32 = arith.constant 0 : i32
    %c0_i32_0 = arith.constant 0 : i32
    return %arg0, %c0_i32 : i32, i32
  }
  func.func @transform_5(%arg0: i32, %arg1: i32) -> (i32, i32) {
    %c0_i32 = arith.constant 0 : i32
    %c0_i32_0 = arith.constant 0 : i32
    return %arg0, %c0_i32 : i32, i32
  }
}

</mosaic_0001>

<llo_original>
// kernel: tpu_custom_call.1
$region0: #{tpu_custom_call.1}
  #allocation0 [shape = 'u32[]', space=smem, size = 0x4, offset = 0x4, fixed_abs, tag = 'smem constant byte address 0x4 - core index']
  #allocation1 [shape = 'u32[144,128]{1,0:T(1,128)}', space=vmem, size = 0x12000, scoped, tag = 'internal scratch']
  #allocation2 [shape = 'f32[8,32]{1,0:T(8,128)}', space=vmem, size = 0x1000, scoped, tag = 'scratch operand']
  #allocation3 [shape = 'f32[8,32]{1,0:T(8,128)}', space=vmem, size = 0x1000, scoped, tag = 'scratch operand']
  %s0 = inlined_call_operand.hbm [shape: f32[8,8,128], index: 0, kind: input, shape index: {}]
  %s1 = inlined_call_operand.hbm [shape: f32[128,128], index: 1, kind: input, shape index: {}]
  %s2 = inlined_call_operand.hbm [shape: f32[32,128], index: 2, kind: input, shape index: {}]
  %s3 = inlined_call_operand.hbm [shape: f32[8,8,32], index: 3, kind: output, shape index: {0}]
  %s4 = inlined_call_operand.hbm [shape: f32[8,32], index: 4, kind: output, shape index: {1}]
  %s5 = inlined_call_operand.hbm [shape: f32[8,32], index: 5, kind: output, shape index: {2}]
  %6 = xla_tuple %s3, %s4, %s5
  %s7 = sld [smem:[#allocation0]]
  $region86: #{tpu_custom_call.1} parent=0
    _
  %s9 = ssub.s32 1, %s7
  %s10 = scalar_select 0, %s9, %s7
  $region1: #{tpu_custom_call.1} parent=0
    #allocation4 [shape = 'u8[32768]{0}', space=vmem, size = 0x8000, scoped, tag = 'input window, operand 0, single buffered']
    #allocation5 [shape = 's32[1]{0}', space=sflag, size = 0x4, scoped, tag = 'scoped memory for tpu_custom_call.1']
    #allocation6 [shape = 's32[1]{0}', space=sflag, size = 0x4, scoped, tag = 'scoped memory for tpu_custom_call.1']
    #allocation7 [shape = 'u8[65536]{0}', space=vmem, size = 0x10000, scoped, tag = 'input window, operand 1, single buffered']
    #allocation8 [shape = 's32[1]{0}', space=sflag, size = 0x4, scoped, tag = 'scoped memory for tpu_custom_call.1']
    #allocation9 [shape = 'u8[16384]{0}', space=vmem, size = 0x4000, scoped, tag = 'input window, operand 2, single buffered']
    #allocation10 [shape = 'u8[32768]{0}', space=vmem, size = 0x8000, scoped, tag = 'output window, operand 0, single buffered']
    #allocation11 [shape = 'u8[4096]{0}', space=vmem, size = 0x1000, scoped, tag = 'output window, operand 1, single buffered']
    #allocation12 [shape = 's32[1]{0}', space=sflag, size = 0x4, scoped, tag = 'scoped memory for tpu_custom_call.1']
    #allocation13 [shape = 'u8[4096]{0}', space=vmem, size = 0x1000, scoped, tag = 'output window, operand 2, single buffered']
    %11 = vsyncpa [#allocation5], 0
    %12 = vsyncpa [#allocation8], 0
    %13 = vsyncpa [#allocation6], 0
    %14 = vsyncpa [#allocation12], 0
    // Predicated region
    $region2: #{tpu_custom_call.1} parent=1 // pred_check
      _
    $region3: #{tpu_custom_call.1} parent=1 // pred_check_branch
      %16 = sbr.rel (0) target = $region5
    $region4: #{tpu_custom_call.1} parent=1 // pred_region
      %s18 = ssub.s32 1024, 1024
      %19 = vsyncadd [#allocation5], %s18
      %s20 = sshll.u32 [#allocation4], 4
      %s21 = int_to_ptr.vmem [resolvable:$true] %s20
      %26 = dma.hbm_to_vmem [thread:$0]  %s0, 1024, %s21, [#allocation5], 128, 128, 8
    $region5: #{tpu_custom_call.1} parent=1 // pred_fallthru
      _
    // Predicated region
    $region6: #{tpu_custom_call.1} parent=1 // pred_check
      _
    $region7: #{tpu_custom_call.1} parent=1 // pred_check_branch
      %28 = sbr.rel (0) target = $region9
    $region8: #{tpu_custom_call.1} parent=1 // pred_region
      %s30 = ssub.s32 2048, 2048
      %31 = vsyncadd [#allocation8], %s30
      %s32 = sshll.u32 [#allocation7], 4
      %s33 = int_to_ptr.vmem [resolvable:$true] %s32
      %38 = dma.hbm_to_vmem [thread:$0]  %s1, 2048, %s33, [#allocation8], 128, 128, 8
    $region9: #{tpu_custom_call.1} parent=1 // pred_fallthru
      _
    // Predicated region
    $region10: #{tpu_custom_call.1} parent=1 // pred_check
      _
    $region11: #{tpu_custom_call.1} parent=1 // pred_check_branch
      %40 = sbr.rel (0) target = $region13
    $region12: #{tpu_custom_call.1} parent=1 // pred_region
      %s42 = ssub.s32 512, 512
      %43 = vsyncadd [#allocation8], %s42
      %s44 = sshll.u32 [#allocation9], 4
      %s45 = int_to_ptr.vmem [resolvable:$true] %s44
      %50 = dma.hbm_to_vmem [thread:$0]  %s2, 512, %s45, [#allocation8], 128, 128, 8
    $region13: #{tpu_custom_call.1} parent=1 // pred_fallthru
      _
    // Predicated region
    $region14: #{tpu_custom_call.1} parent=1 // pred_check
      _
    $region15: #{tpu_custom_call.1} parent=1 // pred_check_branch
      %52 = sbr.rel (0) target = $region17
    $region16: #{tpu_custom_call.1} parent=1 // pred_region
      %53 = dma.done [#allocation5], 1024
    $region17: #{tpu_custom_call.1} parent=1 // pred_fallthru
      _
    // Predicated region
    $region18: #{tpu_custom_call.1} parent=1 // pred_check
      _
    $region19: #{tpu_custom_call.1} parent=1 // pred_check_branch
      %55 = sbr.rel (0) target = $region21
    $region20: #{tpu_custom_call.1} parent=1 // pred_region
      %56 = dma.done [#allocation8], 2048
    $region21: #{tpu_custom_call.1} parent=1 // pred_fallthru
      _
    // Predicated region
    $region22: #{tpu_custom_call.1} parent=1 // pred_check
      _
    $region23: #{tpu_custom_call.1} parent=1 // pred_check_branch
      %58 = sbr.rel (0) target = $region25
    $region24: #{tpu_custom_call.1} parent=1 // pred_region
      %59 = dma.done [#allocation8], 512
    $region25: #{tpu_custom_call.1} parent=1 // pred_fallthru
      _
    %p60 = scmp.eq.s32.totalorder 0, 0
    // Predicated region
    $region26: #{tpu_custom_call.1} parent=1 // pred_check
      %p61 = pneg %p60
    $region27: #{tpu_custom_call.1} parent=1 // pred_check_branch
      %63 = sbr.rel (%p61) target = $region29
    $region28: #{tpu_custom_call.1} parent=1 // pred_region
      %vm64 = vcmask 261120
      %65 = vst.msk [vmem:[#allocation2] sm:$0xff] %vm64, 0.0
      %66 = vst.msk [vmem:[#allocation3] sm:$0xff] %vm64, 0.0
    $region29: #{tpu_custom_call.1} parent=1 // pred_fallthru
      _
    %v67 = vld [vmem:[#allocation7] sm:$0xff]
    %v68 = vld [vmem:[#allocation7 + $0x8] sm:$0xff]
    %v69 = vld [vmem:[#allocation7 + $0x10] sm:$0xff]
    %v70 = vld [vmem:[#allocation7 + $0x18] sm:$0xff]
    %v71 = vld [vmem:[#allocation7 + $0x20] sm:$0xff]
    %v72 = vld [vmem:[#allocation7 + $0x28] sm:$0xff]
    %v73 = vld [vmem:[#allocation7 + $0x30] sm:$0xff]
    %v74 = vld [vmem:[#allocation7 + $0x38] sm:$0xff]
    %v75 = vld [vmem:[#allocation7 + $0x40] sm:$0xff]
    %v76 = vld [vmem:[#allocation7 + $0x48] sm:$0xff]
    %v77 = vld [vmem:[#allocation7 + $0x50] sm:$0xff]
    %v78 = vld [vmem:[#allocation7 + $0x58] sm:$0xff]
    %v79 = vld [vmem:[#allocation7 + $0x60] sm:$0xff]
    %v80 = vld [vmem:[#allocation7 + $0x68] sm:$0xff]
    %v81 = vld [vmem:[#allocation7 + $0x70] sm:$0xff]
    %v82 = vld [vmem:[#allocation7 + $0x78] sm:$0xff]
    %v83 = vld [vmem:[#allocation9] sm:$0xff]
    %v84 = vld [vmem:[#allocation9 + $0x8] sm:$0xff]
    %v85 = vld [vmem:[#allocation9 + $0x10] sm:$0xff]
    %v86 = vld [vmem:[#allocation9 + $0x18] sm:$0xff]
    %v87 = vld [vmem:[#allocation2] sm:$0xff]
    %v88 = vld [vmem:[#allocation3] sm:$0xff]
    %v89 = vld [vmem:[#allocation4] sm:$0xff]
    %vm90 = vcmask 261120
    %v92 = vsel %vm90, %v87, 0
    %94 = vmatprep.subr.mxu0 0.0
    %95 = vmatpush1.msra.mxu0 0.0
    %96 = vmatprep.subr.mxu0 0.0
    %97 = vmatpush1.msra.mxu0 0.0
    %98 = vmatprep.subr.mxu0 0.0
    %99 = vmatpush1.msra.mxu0 0.0
    %100 = vmatprep.subr.mxu0 0.0
    %101 = vmatpush1.msra.mxu0 0.0
    %102 = vmatprep.subr.mxu0 0.0
    %103 = vmatpush1.msra.mxu0 0.0
    %104 = vmatprep.subr.mxu0 0.0
    %105 = vmatpush1.msra.mxu0 0.0
    %106 = vmatprep.subr.mxu0 0.0
    %107 = vmatpush1.msra.mxu0 0.0
    %108 = vmatprep.subr.mxu0 0.0
    %109 = vmatpush1.msra.mxu0 0.0
    %110 = vmatprep.subr.mxu0 0.0
    %111 = vmatpush1.msra.mxu0 0.0
    %112 = vmatprep.subr.mxu0 0.0
    %113 = vmatpush1.msra.mxu0 0.0
    %114 = vmatprep.subr.mxu0 0.0
    %115 = vmatpush1.msra.mxu0 0.0
    %116 = vmatprep.subr.mxu0 0.0
    %117 = vmatpush1.msra.mxu0 0.0
    %118 = vmatprep.subr.mxu0 0.0
    %119 = vmatpush1.msra.mxu0 %v86
    %120 = vmatprep.subr.mxu0 0.0
    %121 = vmatpush1.msra.mxu0 %v85
    %122 = vmatprep.subr.mxu0 0.0
    %123 = vmatpush1.msra.mxu0 %v84
    %124 = vmatprep.subr.mxu0 0.0
    %125 = vmatpush1.msra.mxu0 %v83
    %126 = vmatprep.subr.mxu0 0.0
    %127 = vmatpush2.msra.mxu0 0.0
    %128 = vmatprep.subr.mxu0 0.0
    %129 = vmatpush2.msra.mxu0 0.0
    %130 = vmatprep.subr.mxu0 0.0
    %131 = vmatpush2.msra.mxu0 0.0
    %132 = vmatprep.subr.mxu0 0.0
    %133 = vmatpush2.msra.mxu0 0.0
    %134 = vmatprep.subr.mxu0 0.0
    %135 = vmatpush2.msra.mxu0 0.0
    %136 = vmatprep.subr.mxu0 0.0
    %137 = vmatpush2.msra.mxu0 0.0
    %138 = vmatprep.subr.mxu0 0.0
    %139 = vmatpush2.msra.mxu0 0.0
    %140 = vmatprep.subr.mxu0 0.0
    %141 = vmatpush2.msra.mxu0 0.0
    %142 = vmatprep.subr.mxu0 0.0
    %143 = vmatpush2.msra.mxu0 0.0
    %144 = vmatprep.subr.mxu0 0.0
    %145 = vmatpush2.msra.mxu0 0.0
    %146 = vmatprep.subr.mxu0 0.0
    %147 = vmatpush2.msra.mxu0 0.0
    %148 = vmatprep.subr.mxu0 0.0
    %149 = vmatpush2.msra.mxu0 0.0
    %150 = vmatprep.subr.mxu0 0.0
    %151 = vmatpush2.msra.mxu0 0.0
    %152 = vmatprep.subr.mxu0 0.0
    %153 = vmatpush2.msra.mxu0 0.0
    %154 = vmatprep.subr.mxu0 0.0
    %155 = vmatpush2.msra.mxu0 0.0
    %156 = vmatprep.subr.mxu0 0.0
    %157 = vmatpush2.msra.mxu0 0.0
    %158 = vmatprep.mubr.f32.mxu0 0.0
    %159 = vmatmul.mubr.f32.gmra.mxu0 %v92
    %v160 = vpop.f32.mrf.mxu0
    %v161 = vadd.f32 0.0, %v160
    %v162 = vpop.f32.mrf.mxu0
    %163 = vdwg.mxu0
    %164 = vmatprep.subr.mxu0 0.0
    %165 = vmatpush1.msra.mxu0 %v82
    %166 = vmatprep.subr.mxu0 0.0
    %167 = vmatpush1.msra.mxu0 %v81
    %168 = vmatprep.subr.mxu0 0.0
    %169 = vmatpush1.msra.mxu0 %v80
    %170 = vmatprep.subr.mxu0 0.0
    %171 = vmatpush1.msra.mxu0 %v79
    %172 = vmatprep.subr.mxu0 0.0
    %173 = vmatpush1.msra.mxu0 %v78
    %174 = vmatprep.subr.mxu0 0.0
    %175 = vmatpush1.msra.mxu0 %v77
    %176 = vmatprep.subr.mxu0 0.0
    %177 = vmatpush1.msra.mxu0 %v76
    %178 = vmatprep.subr.mxu0 0.0
    %179 = vmatpush1.msra.mxu0 %v75
    %180 = vmatprep.subr.mxu0 0.0
    %181 = vmatpush1.msra.mxu0 %v74
    %182 = vmatprep.subr.mxu0 0.0
    %183 = vmatpush1.msra.mxu0 %v73
    %184 = vmatprep.subr.mxu0 0.0
    %185 = vmatpush1.msra.mxu0 %v72
    %186 = vmatprep.subr.mxu0 0.0
    %187 = vmatpush1.msra.mxu0 %v71
    %188 = vmatprep.subr.mxu0 0.0
    %189 = vmatpush1.msra.mxu0 %v70
    %190 = vmatprep.subr.mxu0 0.0
    %191 = vmatpush1.msra.mxu0 %v69
    %192 = vmatprep.subr.mxu0 0.0
    %193 = vmatpush1.msra.mxu0 %v68
    %194 = vmatprep.subr.mxu0 0.0
    %195 = vmatpush1.msra.mxu0 %v67
    %196 = vmatprep.subr.mxu0 0.0
    %197 = vmatpush2.msra.mxu0 0.0
    %198 = vmatprep.subr.mxu0 0.0
    %199 = vmatpush2.msra.mxu0 0.0
    %200 = vmatprep.subr.mxu0 0.0
    %201 = vmatpush2.msra.mxu0 0.0
    %202 = vmatprep.subr.mxu0 0.0
    %203 = vmatpush2.msra.mxu0 0.0
    %204 = vmatprep.subr.mxu0 0.0
    %205 = vmatpush2.msra.mxu0 0.0
    %206 = vmatprep.subr.mxu0 0.0
    %207 = vmatpush2.msra.mxu0 0.0
    %208 = vmatprep.subr.mxu0 0.0
    %209 = vmatpush2.msra.mxu0 0.0
    %210 = vmatprep.subr.mxu0 0.0
    %211 = vmatpush2.msra.mxu0 0.0
    %212 = vmatprep.subr.mxu0 0.0
    %213 = vmatpush2.msra.mxu0 0.0
    %214 = vmatprep.subr.mxu0 0.0
    %215 = vmatpush2.msra.mxu0 0.0
    %216 = vmatprep.subr.mxu0 0.0
    %217 = vmatpush2.msra.mxu0 0.0
    %218 = vmatprep.subr.mxu0 0.0
    %219 = vmatpush2.msra.mxu0 0.0
    %220 = vmatprep.subr.mxu0 0.0
    %221 = vmatpush2.msra.mxu0 0.0
    %222 = vmatprep.subr.mxu0 0.0
    %223 = vmatpush2.msra.mxu0 0.0
    %224 = vmatprep.subr.mxu0 0.0
    %225 = vmatpush2.msra.mxu0 0.0
    %226 = vmatprep.subr.mxu0 0.0
    %227 = vmatpush2.msra.mxu0 0.0
    %228 = vmatprep.mubr.f32.mxu0 0.0
    %229 = vmatmul.mubr.f32.gmra.mxu0 %v89
    %v230 = vpop.f32.mrf.mxu0
    %v231 = vadd.f32 %v161, %v230
    %v232 = vpop.f32.mrf.mxu0
    %233 = vdwg.mxu0
    %v234 = vtanh.pop %v231
    %v235 = vmul.f32 %v234, 0.5
    %v236 = vadd.f32 %v235, 0.5
    %v237 = vmul.f32 %v236, %v88
    %239 = vrot.lane.b32.xlu0 %v234, 96
    %v240 = vpop.permute.xlu0 %239
    %v242 = vmul.f32 %v236, %v240
    %244 = vrot.lane.b32.xlu0 %v242, 96
    %v245 = vpop.permute.xlu0 %244
    %v247 = vadd.f32 %v237, %v245
    %v248 = vtanh.pop %v247
    %250 = vrot.lane.b32.xlu0 %v248, 96
    %v251 = vpop.permute.xlu0 %250
    %v253 = vmul.f32 %v236, %v251
    %255 = vrot.lane.b32.xlu0 %v253, 32
    %v256 = vpop.permute.xlu0 %255
    %258 = vst.msk [vmem:[#allocation10] sm:$0xff] %vm90, %v256
    %s259 = smul.u32 0, 8
    %p260 = scmp.eq.s32.totalorder %s259, 7
    // Predicated region
    $region30: #{tpu_custom_call.1} parent=1 // pred_check
      %p261 = pneg %p260
    $region31: #{tpu_custom_call.1} parent=1 // pred_check_branch
      %263 = sbr.rel (%p261) target = $region33
    $region32: #{tpu_custom_call.1} parent=1 // pred_region
      %264 = vst.msk [vmem:[#allocation11] sm:$0xff] %vm90, %v256
      %265 = vst.msk [vmem:[#allocation13] sm:$0xff] %vm90, %v247
    $region33: #{tpu_custom_call.1} parent=1 // pred_fallthru
      _
    %s266 = scalar_lea.vmem [#allocation4], 8
    %v267 = vld [vmem:[%s266] sm:$0xff]
    %v268 = vsel %vm90, %v256, 0
    %270 = vmatprep.subr.mxu0 0.0
    %271 = vmatpush1.msra.mxu0 0.0
    %272 = vmatprep.subr.mxu0 0.0
    %273 = vmatpush1.msra.mxu0 0.0
    %274 = vmatprep.subr.mxu0 0.0
    %275 = vmatpush1.msra.mxu0 0.0
    %276 = vmatprep.subr.mxu0 0.0
    %277 = vmatpush1.msra.mxu0 0.0
    %278 = vmatprep.subr.mxu0 0.0
    %279 = vmatpush1.msra.mxu0 0.0
    %280 = vmatprep.subr.mxu0 0.0
    %281 = vmatpush1.msra.mxu0 0.0
    %282 = vmatprep.subr.mxu0 0.0
    %283 = vmatpush1.msra.mxu0 0.0
    %284 = vmatprep.subr.mxu0 0.0
    %285 = vmatpush1.msra.mxu0 0.0
    %286 = vmatprep.subr.mxu0 0.0
    %287 = vmatpush1.msra.mxu0 0.0
    %288 = vmatprep.subr.mxu0 0.0
    %289 = vmatpush1.msra.mxu0 0.0
    %290 = vmatprep.subr.mxu0 0.0
    %291 = vmatpush1.msra.mxu0 0.0
    %292 = vmatprep.subr.mxu0 0.0
    %293 = vmatpush1.msra.mxu0 0.0
    %294 = vmatprep.subr.mxu0 0.0
    %295 = vmatpush1.msra.mxu0 %v86
    %296 = vmatprep.subr.mxu0 0.0
    %297 = vmatpush1.msra.mxu0 %v85
    %298 = vmatprep.subr.mxu0 0.0
    %299 = vmatpush1.msra.mxu0 %v84
    %300 = vmatprep.subr.mxu0 0.0
    %301 = vmatpush1.msra.mxu0 %v83
    %302 = vmatprep.subr.mxu0 0.0
    %303 = vmatpush2.msra.mxu0 0.0
    %304 = vmatprep.subr.mxu0 0.0
    %305 = vmatpush2.msra.mxu0 0.0
    %306 = vmatprep.subr.mxu0 0.0
    %307 = vmatpush2.msra.mxu0 0.0
    %308 = vmatprep.subr.mxu0 0.0
    %309 = vmatpush2.msra.mxu0 0.0
    %310 = vmatprep.subr.mxu0 0.0
    %311 = vmatpush2.msra.mxu0 0.0
    %312 = vmatprep.subr.mxu0 0.0
    %313 = vmatpush2.msra.mxu0 0.0
    %314 = vmatprep.subr.mxu0 0.0
    %315 = vmatpush2.msra.mxu0 0.0
    %316 = vmatprep.subr.mxu0 0.0
    %317 = vmatpush2.msra.mxu0 0.0
    %318 = vmatprep.subr.mxu0 0.0
    %319 = vmatpush2.msra.mxu0 0.0
    %320 = vmatprep.subr.mxu0 0.0
    %321 = vmatpush2.msra.mxu0 0.0
    %322 = vmatprep.subr.mxu0 0.0
    %323 = vmatpush2.msra.mxu0 0.0
    %324 = vmatprep.subr.mxu0 0.0
    %325 = vmatpush2.msra.mxu0 0.0
    %326 = vmatprep.subr.mxu0 0.0
    %327 = vmatpush2.msra.mxu0 0.0
    %328 = vmatprep.subr.mxu0 0.0
    %329 = vmatpush2.msra.mxu0 0.0
    %330 = vmatprep.subr.mxu0 0.0
    %331 = vmatpush2.msra.mxu0 0.0
    %332 = vmatprep.subr.mxu0 0.0
    %333 = vmatpush2.msra.mxu0 0.0
    %334 = vmatprep.mubr.f32.mxu0 0.0
    %335 = vmatmul.mubr.f32.gmra.mxu0 %v268
    %v336 = vpop.f32.mrf.mxu0
    %v337 = vadd.f32 0.0, %v336
    %v338 = vpop.f32.mrf.mxu0
    %339 = vdwg.mxu0
    %340 = vmatprep.subr.mxu0 0.0
    %341 = vmatpush1.msra.mxu0 %v82
    %342 = vmatprep.subr.mxu0 0.0
    %343 = vmatpush1.msra.mxu0 %v81
    %344 = vmatprep.subr.mxu0 0.0
    %345 = vmatpush1.msra.mxu0 %v80
    %346 = vmatprep.subr.mxu0 0.0
    %347 = vmatpush1.msra.mxu0 %v79
    %348 = vmatprep.subr.mxu0 0.0
    %349 = vmatpush1.msra.mxu0 %v78
    %350 = vmatprep.subr.mxu0 0.0
    %351 = vmatpush1.msra.mxu0 %v77
    %352 = vmatprep.subr.mxu0 0.0
    %353 = vmatpush1.msra.mxu0 %v76
    %354 = vmatprep.subr.mxu0 0.0
    %355 = vmatpush1.msra.mxu0 %v75
    %356 = vmatprep.subr.mxu0 0.0
    %357 = vmatpush1.msra.mxu0 %v74
    %358 = vmatprep.subr.mxu0 0.0
    %359 = vmatpush1.msra.mxu0 %v73
    %360 = vmatprep.subr.mxu0 0.0
    %361 = vmatpush1.msra.mxu0 %v72
    %362 = vmatprep.subr.mxu0 0.0
    %363 = vmatpush1.msra.mxu0 %v71
    %364 = vmatprep.subr.mxu0 0.0
    %365 = vmatpush1.msra.mxu0 %v70
    %366 = vmatprep.subr.mxu0 0.0
    %367 = vmatpush1.msra.mxu0 %v69
    %368 = vmatprep.subr.mxu0 0.0
    %369 = vmatpush1.msra.mxu0 %v68
    %370 = vmatprep.subr.mxu0 0.0
    %371 = vmatpush1.msra.mxu0 %v67
    %372 = vmatprep.subr.mxu0 0.0
    %373 = vmatpush2.msra.mxu0 0.0
    %374 = vmatprep.subr.mxu0 0.0
    %375 = vmatpush2.msra.mxu0 0.0
    %376 = vmatprep.subr.mxu0 0.0
    %377 = vmatpush2.msra.mxu0 0.0
    %378 = vmatprep.subr.mxu0 0.0
    %379 = vmatpush2.msra.mxu0 0.0
    %380 = vmatprep.subr.mxu0 0.0
    %381 = vmatpush2.msra.mxu0 0.0
    %382 = vmatprep.subr.mxu0 0.0
    %383 = vmatpush2.msra.mxu0 0.0
    %384 = vmatprep.subr.mxu0 0.0
    %385 = vmatpush2.msra.mxu0 0.0
    %386 = vmatprep.subr.mxu0 0.0
    %387 = vmatpush2.msra.mxu0 0.0
    %388 = vmatprep.subr.mxu0 0.0
    %389 = vmatpush2.msra.mxu0 0.0
    %390 = vmatprep.subr.mxu0 0.0
    %391 = vmatpush2.msra.mxu0 0.0
    %392 = vmatprep.subr.mxu0 0.0
    %393 = vmatpush2.msra.mxu0 0.0
    %394 = vmatprep.subr.mxu0 0.0
    %395 = vmatpush2.msra.mxu0 0.0
    %396 = vmatprep.subr.mxu0 0.0
    %397 = vmatpush2.msra.mxu0 0.0
    %398 = vmatprep.subr.mxu0 0.0
    %399 = vmatpush2.msra.mxu0 0.0
    %400 = vmatprep.subr.mxu0 0.0
    %401 = vmatpush2.msra.mxu0 0.0
    %402 = vmatprep.subr.mxu0 0.0
    %403 = vmatpush2.msra.mxu0 0.0
    %404 = vmatprep.mubr.f32.mxu0 0.0
    %405 = vmatmul.mubr.f32.gmra.mxu0 %v267
    %v406 = vpop.f32.mrf.mxu0
    %v407 = vadd.f32 %v337, %v406
    %v408 = vpop.f32.mrf.mxu0
    %409 = vdwg.mxu0
    %v410 = vtanh.pop %v407
    %v411 = vmul.f32 %v410, 0.5
    %v412 = vadd.f32 %v411, 0.5
    %v413 = vmul.f32 %v412, %v247
    %415 = vrot.lane.b32.xlu0 %v410, 96
    %v416 = vpop.permute.xlu0 %415
    %v418 = vmul.f32 %v412, %v416
    %420 = vrot.lane.b32.xlu0 %v418, 96
    %v421 = vpop.permute.xlu0 %420
    %v423 = vadd.f32 %v413, %v421
    %v424 = vtanh.pop %v423
    %426 = vrot.lane.b32.xlu0 %v424, 96
    %v427 = vpop.permute.xlu0 %426
    %v429 = vmul.f32 %v412, %v427
    %431 = vrot.lane.b32.xlu0 %v429, 32
    %v432 = vpop.permute.xlu0 %431
    %s434 = scalar_lea.vmem [#allocation10], 8
    %435 = vst.msk [vmem:[%s434] sm:$0xff] %vm90, %v432
    %s436 = sadd.s32 %s259, 1
    %p437 = scmp.eq.s32.totalorder %s436, 7
    // Predicated region
    $region34: #{tpu_custom_call.1} parent=1 // pred_check
      %p438 = pneg %p437
    $region35: #{tpu_custom_call.1} parent=1 // pred_check_branch
      %440 = sbr.rel (%p438) target = $region37
    $region36: #{tpu_custom_call.1} parent=1 // pred_region
      %441 = vst.msk [vmem:[#allocation11] sm:$0xff] %vm90, %v432
      %442 = vst.msk [vmem:[#allocation13] sm:$0xff] %vm90, %v423
    $region37: #{tpu_custom_call.1} parent=1 // pred_fallthru
      _
    %s443 = scalar_lea.vmem [#allocation4], 16
    %v444 = vld [vmem:[%s443] sm:$0xff]
    %v445 = vsel %vm90, %v432, 0
    %447 = vmatprep.subr.mxu0 0.0
    %448 = vmatpush1.msra.mxu0 0.0
    %449 = vmatprep.subr.mxu0 0.0
    %450 = vmatpush1.msra.mxu0 0.0
    %451 = vmatprep.subr.mxu0 0.0
    %452 = vmatpush1.msra.mxu0 0.0
    %453 = vmatprep.subr.mxu0 0.0
    %454 = vmatpush1.msra.mxu0 0.0
    %455 = vmatprep.subr.mxu0 0.0
    %456 = vmatpush1.msra.mxu0 0.0
    %457 = vmatprep.subr.mxu0 0.0
    %458 = vmatpush1.msra.mxu0 0.0
    %459 = vmatprep.subr.mxu0 0.0
    %460 = vmatpush1.msra.mxu0 0.0
    %461 = vmatprep.subr.mxu0 0.0
    %462 = vmatpush1.msra.mxu0 0.0
    %463 = vmatprep.subr.mxu0 0.0
    %464 = vmatpush1.msra.mxu0 0.0
    %465 = vmatprep.subr.mxu0 0.0
    %466 = vmatpush1.msra.mxu0 0.0
    %467 = vmatprep.subr.mxu0 0.0
    %468 = vmatpush1.msra.mxu0 0.0
    %469 = vmatprep.subr.mxu0 0.0
    %470 = vmatpush1.msra.mxu0 0.0
    %471 = vmatprep.subr.mxu0 0.0
    %472 = vmatpush1.msra.mxu0 %v86
    %473 = vmatprep.subr.mxu0 0.0
    %474 = vmatpush1.msra.mxu0 %v85
    %475 = vmatprep.subr.mxu0 0.0
    %476 = vmatpush1.msra.mxu0 %v84
    %477 = vmatprep.subr.mxu0 0.0
    %478 = vmatpush1.msra.mxu0 %v83
    %479 = vmatprep.subr.mxu0 0.0
    %480 = vmatpush2.msra.mxu0 0.0
    %481 = vmatprep.subr.mxu0 0.0
    %482 = vmatpush2.msra.mxu0 0.0
    %483 = vmatprep.subr.mxu0 0.0
    %484 = vmatpush2.msra.mxu0 0.0
    %485 = vmatprep.subr.mxu0 0.0
    %486 = vmatpush2.msra.mxu0 0.0
    %487 = vmatprep.subr.mxu0 0.0
    %488 = vmatpush2.msra.mxu0 0.0
    %489 = vmatprep.subr.mxu0 0.0
    %490 = vmatpush2.msra.mxu0 0.0
    %491 = vmatprep.subr.mxu0 0.0
    %492 = vmatpush2.msra.mxu0 0.0
    %493 = vmatprep.subr.mxu0 0.0
    %494 = vmatpush2.msra.mxu0 0.0
    %495 = vmatprep.subr.mxu0 0.0
    %496 = vmatpush2.msra.mxu0 0.0
    %497 = vmatprep.subr.mxu0 0.0
    %498 = vmatpush2.msra.mxu0 0.0
    %499 = vmatprep.subr.mxu0 0.0
    %500 = vmatpush2.msra.mxu0 0.0
    %501 = vmatprep.subr.mxu0 0.0
    %502 = vmatpush2.msra.mxu0 0.0
    %503 = vmatprep.subr.mxu0 0.0
    %504 = vmatpush2.msra.mxu0 0.0
    %505 = vmatprep.subr.mxu0 0.0
    %506 = vmatpush2.msra.mxu0 0.0
    %507 = vmatprep.subr.mxu0 0.0
    %508 = vmatpush2.msra.mxu0 0.0
    %509 = vmatprep.subr.mxu0 0.0
    %510 = vmatpush2.msra.mxu0 0.0
    %511 = vmatprep.mubr.f32.mxu0 0.0
    %512 = vmatmul.mubr.f32.gmra.mxu0 %v445
    %v513 = vpop.f32.mrf.mxu0
    %v514 = vadd.f32 0.0, %v513
    %v515 = vpop.f32.mrf.mxu0
    %516 = vdwg.mxu0
    %517 = vmatprep.subr.mxu0 0.0
    %518 = vmatpush1.msra.mxu0 %v82
    %519 = vmatprep.subr.mxu0 0.0
    %520 = vmatpush1.msra.mxu0 %v81
    %521 = vmatprep.subr.mxu0 0.0
    %522 = vmatpush1.msra.mxu0 %v80
    %523 = vmatprep.subr.mxu0 0.0
    %524 = vmatpush1.msra.mxu0 %v79
    %525 = vmatprep.subr.mxu0 0.0
    %526 = vmatpush1.msra.mxu0 %v78
    %527 = vmatprep.subr.mxu0 0.0
    %528 = vmatpush1.msra.mxu0 %v77
    %529 = vmatprep.subr.mxu0 0.0
    %530 = vmatpush1.msra.mxu0 %v76
    %531 = vmatprep.subr.mxu0 0.0
    %532 = vmatpush1.msra.mxu0 %v75
    %533 = vmatprep.subr.mxu0 0.0
    %534 = vmatpush1.msra.mxu0 %v74
    %535 = vmatprep.subr.mxu0 0.0
    %536 = vmatpush1.msra.mxu0 %v73
    %537 = vmatprep.subr.mxu0 0.0
    %538 = vmatpush1.msra.mxu0 %v72
    %539 = vmatprep.subr.mxu0 0.0
    %540 = vmatpush1.msra.mxu0 %v71
    %541 = vmatprep.subr.mxu0 0.0
    %542 = vmatpush1.msra.mxu0 %v70
    %543 = vmatprep.subr.mxu0 0.0
    %544 = vmatpush1.msra.mxu0 %v69
    %545 = vmatprep.subr.mxu0 0.0
    %546 = vmatpush1.msra.mxu0 %v68
    %547 = vmatprep.subr.mxu0 0.0
    %548 = vmatpush1.msra.mxu0 %v67
    %549 = vmatprep.subr.mxu0 0.0
    %550 = vmatpush2.msra.mxu0 0.0
    %551 = vmatprep.subr.mxu0 0.0
    %552 = vmatpush2.msra.mxu0 0.0
    %553 = vmatprep.subr.mxu0 0.0
    %554 = vmatpush2.msra.mxu0 0.0
    %555 = vmatprep.subr.mxu0 0.0
    %556 = vmatpush2.msra.mxu0 0.0
    %557 = vmatprep.subr.mxu0 0.0
    %558 = vmatpush2.msra.mxu0 0.0
    %559 = vmatprep.subr.mxu0 0.0
    %560 = vmatpush2.msra.mxu0 0.0
    %561 = vmatprep.subr.mxu0 0.0
    %562 = vmatpush2.msra.mxu0 0.0
    %563 = vmatprep.subr.mxu0 0.0
    %564 = vmatpush2.msra.mxu0 0.0
    %565 = vmatprep.subr.mxu0 0.0
    %566 = vmatpush2.msra.mxu0 0.0
    %567 = vmatprep.subr.mxu0 0.0
    %568 = vmatpush2.msra.mxu0 0.0
    %569 = vmatprep.subr.mxu0 0.0
    %570 = vmatpush2.msra.mxu0 0.0
    %571 = vmatprep.subr.mxu0 0.0
    %572 = vmatpush2.msra.mxu0 0.0
    %573 = vmatprep.subr.mxu0 0.0
    %574 = vmatpush2.msra.mxu0 0.0
    %575 = vmatprep.subr.mxu0 0.0
    %576 = vmatpush2.msra.mxu0 0.0
    %577 = vmatprep.subr.mxu0 0.0
    %578 = vmatpush2.msra.mxu0 0.0
    %579 = vmatprep.subr.mxu0 0.0
    %580 = vmatpush2.msra.mxu0 0.0
    %581 = vmatprep.mubr.f32.mxu0 0.0
    %582 = vmatmul.mubr.f32.gmra.mxu0 %v444
    %v583 = vpop.f32.mrf.mxu0
    %v584 = vadd.f32 %v514, %v583
    %v585 = vpop.f32.mrf.mxu0
    %586 = vdwg.mxu0
    %v587 = vtanh.pop %v584
    %v588 = vmul.f32 %v587, 0.5
    %v589 = vadd.f32 %v588, 0.5
    %v590 = vmul.f32 %v589, %v423
    %592 = vrot.lane.b32.xlu0 %v587, 96
    %v593 = vpop.permute.xlu0 %592
    %v595 = vmul.f32 %v589, %v593
    %597 = vrot.lane.b32.xlu0 %v595, 96
    %v598 = vpop.permute.xlu0 %597
    %v600 = vadd.f32 %v590, %v598
    %v601 = vtanh.pop %v600
    %603 = vrot.lane.b32.xlu0 %v601, 96
    %v604 = vpop.permute.xlu0 %603
    %v606 = vmul.f32 %v589, %v604
    %608 = vrot.lane.b32.xlu0 %v606, 32
    %v609 = vpop.permute.xlu0 %608
    %s611 = scalar_lea.vmem [#allocation10], 16
    %612 = vst.msk [vmem:[%s611] sm:$0xff] %vm90, %v609
    %s613 = sadd.s32 %s259, 2
    %p614 = scmp.eq.s32.totalorder %s613, 7
    // Predicated region
    $region38: #{tpu_custom_call.1} parent=1 // pred_check
      %p615 = pneg %p614
    $region39: #{tpu_custom_call.1} parent=1 // pred_check_branch
      %617 = sbr.rel (%p615) target = $region41
    $region40: #{tpu_custom_call.1} parent=1 // pred_region
      %618 = vst.msk [vmem:[#allocation11] sm:$0xff] %vm90, %v609
      %619 = vst.msk [vmem:[#allocation13] sm:$0xff] %vm90, %v600
    $region41: #{tpu_custom_call.1} parent=1 // pred_fallthru
      _
    %s620 = scalar_lea.vmem [#allocation4], 24
    %v621 = vld [vmem:[%s620] sm:$0xff]
    %v622 = vsel %vm90, %v609, 0
    %624 = vmatprep.subr.mxu0 0.0
    %625 = vmatpush1.msra.mxu0 0.0
    %626 = vmatprep.subr.mxu0 0.0
    %627 = vmatpush1.msra.mxu0 0.0
    %628 = vmatprep.subr.mxu0 0.0
    %629 = vmatpush1.msra.mxu0 0.0
    %630 = vmatprep.subr.mxu0 0.0
    %631 = vmatpush1.msra.mxu0 0.0
    %632 = vmatprep.subr.mxu0 0.0
    %633 = vmatpush1.msra.mxu0 0.0
    %634 = vmatprep.subr.mxu0 0.0
    %635 = vmatpush1.msra.mxu0 0.0
    %636 = vmatprep.subr.mxu0 0.0
    %637 = vmatpush1.msra.mxu0 0.0
    %638 = vmatprep.subr.mxu0 0.0
    %639 = vmatpush1.msra.mxu0 0.0
    %640 = vmatprep.subr.mxu0 0.0
    %641 = vmatpush1.msra.mxu0 0.0
    %642 = vmatprep.subr.mxu0 0.0
    %643 = vmatpush1.msra.mxu0 0.0
    %644 = vmatprep.subr.mxu0 0.0
    %645 = vmatpush1.msra.mxu0 0.0
    %646 = vmatprep.subr.mxu0 0.0
    %647 = vmatpush1.msra.mxu0 0.0
    %648 = vmatprep.subr.mxu0 0.0
    %649 = vmatpush1.msra.mxu0 %v86
    %650 = vmatprep.subr.mxu0 0.0
    %651 = vmatpush1.msra.mxu0 %v85
    %652 = vmatprep.subr.mxu0 0.0
    %653 = vmatpush1.msra.mxu0 %v84
    %654 = vmatprep.subr.mxu0 0.0
    %655 = vmatpush1.msra.mxu0 %v83
    %656 = vmatprep.subr.mxu0 0.0
    %657 = vmatpush2.msra.mxu0 0.0
    %658 = vmatprep.subr.mxu0 0.0
    %659 = vmatpush2.msra.mxu0 0.0
    %660 = vmatprep.subr.mxu0 0.0
    %661 = vmatpush2.msra.mxu0 0.0
    %662 = vmatprep.subr.mxu0 0.0
    %663 = vmatpush2.msra.mxu0 0.0
    %664 = vmatprep.subr.mxu0 0.0
    %665 = vmatpush2.msra.mxu0 0.0
    %666 = vmatprep.subr.mxu0 0.0
    %667 = vmatpush2.msra.mxu0 0.0
    %668 = vmatprep.subr.mxu0 0.0
    %669 = vmatpush2.msra.mxu0 0.0
    %670 = vmatprep.subr.mxu0 0.0
    %671 = vmatpush2.msra.mxu0 0.0
    %672 = vmatprep.subr.mxu0 0.0
    %673 = vmatpush2.msra.mxu0 0.0
    %674 = vmatprep.subr.mxu0 0.0
    %675 = vmatpush2.msra.mxu0 0.0
    %676 = vmatprep.subr.mxu0 0.0
    %677 = vmatpush2.msra.mxu0 0.0
    %678 = vmatprep.subr.mxu0 0.0
    %679 = vmatpush2.msra.mxu0 0.0
    %680 = vmatprep.subr.mxu0 0.0
    %681 = vmatpush2.msra.mxu0 0.0
    %682 = vmatprep.subr.mxu0 0.0
    %683 = vmatpush2.msra.mxu0 0.0
    %684 = vmatprep.subr.mxu0 0.0
    %685 = vmatpush2.msra.mxu0 0.0
    %686 = vmatprep.subr.mxu0 0.0
    %687 = vmatpush2.msra.mxu0 0.0
    %688 = vmatprep.mubr.f32.mxu0 0.0
    %689 = vmatmul.mubr.f32.gmra.mxu0 %v622
    %v690 = vpop.f32.mrf.mxu0
    %v691 = vadd.f32 0.0, %v690
    %v692 = vpop.f32.mrf.mxu0
    %693 = vdwg.mxu0
    %694 = vmatprep.subr.mxu0 0.0
    %695 = vmatpush1.msra.mxu0 %v82
    %696 = vmatprep.subr.mxu0 0.0
    %697 = vmatpush1.msra.mxu0 %v81
    %698 = vmatprep.subr.mxu0 0.0
    %699 = vmatpush1.msra.mxu0 %v80
    %700 = vmatprep.subr.mxu0 0.0
    %701 = vmatpush1.msra.mxu0 %v79
    %702 = vmatprep.subr.mxu0 0.0
    %703 = vmatpush1.msra.mxu0 %v78
    %704 = vmatprep.subr.mxu0 0.0
    %705 = vmatpush1.msra.mxu0 %v77
    %706 = vmatprep.subr.mxu0 0.0
    %707 = vmatpush1.msra.mxu0 %v76
    %708 = vmatprep.subr.mxu0 0.0
    %709 = vmatpush1.msra.mxu0 %v75
    %710 = vmatprep.subr.mxu0 0.0
    %711 = vmatpush1.msra.mxu0 %v74
    %712 = vmatprep.subr.mxu0 0.0
    %713 = vmatpush1.msra.mxu0 %v73
    %714 = vmatprep.subr.mxu0 0.0
    %715 = vmatpush1.msra.mxu0 %v72
    %716 = vmatprep.subr.mxu0 0.0
    %717 = vmatpush1.msra.mxu0 %v71
    %718 = vmatprep.subr.mxu0 0.0
    %719 = vmatpush1.msra.mxu0 %v70
    %720 = vmatprep.subr.mxu0 0.0
    %721 = vmatpush1.msra.mxu0 %v69
    %722 = vmatprep.subr.mxu0 0.0
    %723 = vmatpush1.msra.mxu0 %v68
    %724 = vmatprep.subr.mxu0 0.0
    %725 = vmatpush1.msra.mxu0 %v67
    %726 = vmatprep.subr.mxu0 0.0
    %727 = vmatpush2.msra.mxu0 0.0
    %728 = vmatprep.subr.mxu0 0.0
    %729 = vmatpush2.msra.mxu0 0.0
    %730 = vmatprep.subr.mxu0 0.0
    %731 = vmatpush2.msra.mxu0 0.0
    %732 = vmatprep.subr.mxu0 0.0
    %733 = vmatpush2.msra.mxu0 0.0
    %734 = vmatprep.subr.mxu0 0.0
    %735 = vmatpush2.msra.mxu0 0.0
    %736 = vmatprep.subr.mxu0 0.0
    %737 = vmatpush2.msra.mxu0 0.0
    %738 = vmatprep.subr.mxu0 0.0
    %739 = vmatpush2.msra.mxu0 0.0
    %740 = vmatprep.subr.mxu0 0.0
    %741 = vmatpush2.msra.mxu0 0.0
    %742 = vmatprep.subr.mxu0 0.0
    %743 = vmatpush2.msra.mxu0 0.0
    %744 = vmatprep.subr.mxu0 0.0
    %745 = vmatpush2.msra.mxu0 0.0
    %746 = vmatprep.subr.mxu0 0.0
    %747 = vmatpush2.msra.mxu0 0.0
    %748 = vmatprep.subr.mxu0 0.0
    %749 = vmatpush2.msra.mxu0 0.0
    %750 = vmatprep.subr.mxu0 0.0
    %751 = vmatpush2.msra.mxu0 0.0
    %752 = vmatprep.subr.mxu0 0.0
    %753 = vmatpush2.msra.mxu0 0.0
    %754 = vmatprep.subr.mxu0 0.0
    %755 = vmatpush2.msra.mxu0 0.0
    %756 = vmatprep.subr.mxu0 0.0
    %757 = vmatpush2.msra.mxu0 0.0
    %758 = vmatprep.mubr.f32.mxu0 0.0
    %759 = vmatmul.mubr.f32.gmra.mxu0 %v621
    %v760 = vpop.f32.mrf.mxu0
    %v761 = vadd.f32 %v691, %v760
    %v762 = vpop.f32.mrf.mxu0
    %763 = vdwg.mxu0
    %v764 = vtanh.pop %v761
    %v765 = vmul.f32 %v764, 0.5
    %v766 = vadd.f32 %v765, 0.5
    %v767 = vmul.f32 %v766, %v600
    %769 = vrot.lane.b32.xlu0 %v764, 96
    %v770 = vpop.permute.xlu0 %769
    %v772 = vmul.f32 %v766, %v770
    %774 = vrot.lane.b32.xlu0 %v772, 96
    %v775 = vpop.permute.xlu0 %774
    %v777 = vadd.f32 %v767, %v775
    %v778 = vtanh.pop %v777
    %780 = vrot.lane.b32.xlu0 %v778, 96
    %v781 = vpop.permute.xlu0 %780
    %v783 = vmul.f32 %v766, %v781
    %785 = vrot.lane.b32.xlu0 %v783, 32
    %v786 = vpop.permute.xlu0 %785
    %s788 = scalar_lea.vmem [#allocation10], 24
    %789 = vst.msk [vmem:[%s788] sm:$0xff] %vm90, %v786
    %s790 = sadd.s32 %s259, 3
    %p791 = scmp.eq.s32.totalorder %s790, 7
    // Predicated region
    $region42: #{tpu_custom_call.1} parent=1 // pred_check
      %p792 = pneg %p791
    $region43: #{tpu_custom_call.1} parent=1 // pred_check_branch
      %794 = sbr.rel (%p792) target = $region45
    $region44: #{tpu_custom_call.1} parent=1 // pred_region
      %795 = vst.msk [vmem:[#allocation11] sm:$0xff] %vm90, %v786
      %796 = vst.msk [vmem:[#allocation13] sm:$0xff] %vm90, %v777
    $region45: #{tpu_custom_call.1} parent=1 // pred_fallthru
      _
    %s797 = scalar_lea.vmem [#allocation4], 32
    %v798 = vld [vmem:[%s797] sm:$0xff]
    %v799 = vsel %vm90, %v786, 0
    %801 = vmatprep.subr.mxu0 0.0
    %802 = vmatpush1.msra.mxu0 0.0
    %803 = vmatprep.subr.mxu0 0.0
    %804 = vmatpush1.msra.mxu0 0.0
    %805 = vmatprep.subr.mxu0 0.0
    %806 = vmatpush1.msra.mxu0 0.0
    %807 = vmatprep.subr.mxu0 0.0
    %808 = vmatpush1.msra.mxu0 0.0
    %809 = vmatprep.subr.mxu0 0.0
    %810 = vmatpush1.msra.mxu0 0.0
    %811 = vmatprep.subr.mxu0 0.0
    %812 = vmatpush1.msra.mxu0 0.0
    %813 = vmatprep.subr.mxu0 0.0
    %814 = vmatpush1.msra.mxu0 0.0
    %815 = vmatprep.subr.mxu0 0.0
    %816 = vmatpush1.msra.mxu0 0.0
    %817 = vmatprep.subr.mxu0 0.0
    %818 = vmatpush1.msra.mxu0 0.0
    %819 = vmatprep.subr.mxu0 0.0
    %820 = vmatpush1.msra.mxu0 0.0
    %821 = vmatprep.subr.mxu0 0.0
    %822 = vmatpush1.msra.mxu0 0.0
    %823 = vmatprep.subr.mxu0 0.0
    %824 = vmatpush1.msra.mxu0 0.0
    %825 = vmatprep.subr.mxu0 0.0
    %826 = vmatpush1.msra.mxu0 %v86
    %827 = vmatprep.subr.mxu0 0.0
    %828 = vmatpush1.msra.mxu0 %v85
    %829 = vmatprep.subr.mxu0 0.0
    %830 = vmatpush1.msra.mxu0 %v84
    %831 = vmatprep.subr.mxu0 0.0
    %832 = vmatpush1.msra.mxu0 %v83
    %833 = vmatprep.subr.mxu0 0.0
    %834 = vmatpush2.msra.mxu0 0.0
    %835 = vmatprep.subr.mxu0 0.0
    %836 = vmatpush2.msra.mxu0 0.0
    %837 = vmatprep.subr.mxu0 0.0
    %838 = vmatpush2.msra.mxu0 0.0
    %839 = vmatprep.subr.mxu0 0.0
    %840 = vmatpush2.msra.mxu0 0.0
    %841 = vmatprep.subr.mxu0 0.0
    %842 = vmatpush2.msra.mxu0 0.0
    %843 = vmatprep.subr.mxu0 0.0
    %844 = vmatpush2.msra.mxu0 0.0
    %845 = vmatprep.subr.mxu0 0.0
    %846 = vmatpush2.msra.mxu0 0.0
    %847 = vmatprep.subr.mxu0 0.0
    %848 = vmatpush2.msra.mxu0 0.0
    %849 = vmatprep.subr.mxu0 0.0
    %850 = vmatpush2.msra.mxu0 0.0
    %851 = vmatprep.subr.mxu0 0.0
    %852 = vmatpush2.msra.mxu0 0.0
    %853 = vmatprep.subr.mxu0 0.0
    %854 = vmatpush2.msra.mxu0 0.0
    %855 = vmatprep.subr.mxu0 0.0
    %856 = vmatpush2.msra.mxu0 0.0
    %857 = vmatprep.subr.mxu0 0.0
    %858 = vmatpush2.msra.mxu0 0.0
    %859 = vmatprep.subr.mxu0 0.0
    %860 = vmatpush2.msra.mxu0 0.0
    %861 = vmatprep.subr.mxu0 0.0
    %862 = vmatpush2.msra.mxu0 0.0
    %863 = vmatprep.subr.mxu0 0.0
    %864 = vmatpush2.msra.mxu0 0.0
    %865 = vmatprep.mubr.f32.mxu0 0.0
    %866 = vmatmul.mubr.f32.gmra.mxu0 %v799
    %v867 = vpop.f32.mrf.mxu0
    %v868 = vadd.f32 0.0, %v867
    %v869 = vpop.f32.mrf.mxu0
    %870 = vdwg.mxu0
    %871 = vmatprep.subr.mxu0 0.0
    %872 = vmatpush1.msra.mxu0 %v82
    %873 = vmatprep.subr.mxu0 0.0
    %874 = vmatpush1.msra.mxu0 %v81
    %875 = vmatprep.subr.mxu0 0.0
    %876 = vmatpush1.msra.mxu0 %v80
    %877 = vmatprep.subr.mxu0 0.0
    %878 = vmatpush1.msra.mxu0 %v79
    %879 = vmatprep.subr.mxu0 0.0
    %880 = vmatpush1.msra.mxu0 %v78
    %881 = vmatprep.subr.mxu0 0.0
    %882 = vmatpush1.msra.mxu0 %v77
    %883 = vmatprep.subr.mxu0 0.0
    %884 = vmatpush1.msra.mxu0 %v76
    %885 = vmatprep.subr.mxu0 0.0
    %886 = vmatpush1.msra.mxu0 %v75
    %887 = vmatprep.subr.mxu0 0.0
    %888 = vmatpush1.msra.mxu0 %v74
    %889 = vmatprep.subr.mxu0 0.0
    %890 = vmatpush1.msra.mxu0 %v73
    %891 = vmatprep.subr.mxu0 0.0
    %892 = vmatpush1.msra.mxu0 %v72
    %893 = vmatprep.subr.mxu0 0.0
    %894 = vmatpush1.msra.mxu0 %v71
    %895 = vmatprep.subr.mxu0 0.0
    %896 = vmatpush1.msra.mxu0 %v70
    %897 = vmatprep.subr.mxu0 0.0
    %898 = vmatpush1.msra.mxu0 %v69
    %899 = vmatprep.subr.mxu0 0.0
    %900 = vmatpush1.msra.mxu0 %v68
    %901 = vmatprep.subr.mxu0 0.0
    %902 = vmatpush1.msra.mxu0 %v67
    %903 = vmatprep.subr.mxu0 0.0
    %904 = vmatpush2.msra.mxu0 0.0
    %905 = vmatprep.subr.mxu0 0.0
    %906 = vmatpush2.msra.mxu0 0.0
    %907 = vmatprep.subr.mxu0 0.0
    %908 = vmatpush2.msra.mxu0 0.0
    %909 = vmatprep.subr.mxu0 0.0
    %910 = vmatpush2.msra.mxu0 0.0
    %911 = vmatprep.subr.mxu0 0.0
    %912 = vmatpush2.msra.mxu0 0.0
    %913 = vmatprep.subr.mxu0 0.0
    %914 = vmatpush2.msra.mxu0 0.0
    %915 = vmatprep.subr.mxu0 0.0
    %916 = vmatpush2.msra.mxu0 0.0
    %917 = vmatprep.subr.mxu0 0.0
    %918 = vmatpush2.msra.mxu0 0.0
    %919 = vmatprep.subr.mxu0 0.0
    %920 = vmatpush2.msra.mxu0 0.0
    %921 = vmatprep.subr.mxu0 0.0
    %922 = vmatpush2.msra.mxu0 0.0
    %923 = vmatprep.subr.mxu0 0.0
    %924 = vmatpush2.msra.mxu0 0.0
    %925 = vmatprep.subr.mxu0 0.0
    %926 = vmatpush2.msra.mxu0 0.0
    %927 = vmatprep.subr.mxu0 0.0
    %928 = vmatpush2.msra.mxu0 0.0
    %929 = vmatprep.subr.mxu0 0.0
    %930 = vmatpush2.msra.mxu0 0.0
    %931 = vmatprep.subr.mxu0 0.0
    %932 = vmatpush2.msra.mxu0 0.0
    %933 = vmatprep.subr.mxu0 0.0
    %934 = vmatpush2.msra.mxu0 0.0
    %935 = vmatprep.mubr.f32.mxu0 0.0
    %936 = vmatmul.mubr.f32.gmra.mxu0 %v798
    %v937 = vpop.f32.mrf.mxu0
    %v938 = vadd.f32 %v868, %v937
    %v939 = vpop.f32.mrf.mxu0
    %940 = vdwg.mxu0
    %v941 = vtanh.pop %v938
    %v942 = vmul.f32 %v941, 0.5
    %v943 = vadd.f32 %v942, 0.5
    %v944 = vmul.f32 %v943, %v777
    %946 = vrot.lane.b32.xlu0 %v941, 96
    %v947 = vpop.permute.xlu0 %946
    %v949 = vmul.f32 %v943, %v947
    %951 = vrot.lane.b32.xlu0 %v949, 96
    %v952 = vpop.permute.xlu0 %951
    %v954 = vadd.f32 %v944, %v952
    %v955 = vtanh.pop %v954
    %957 = vrot.lane.b32.xlu0 %v955, 96
    %v958 = vpop.permute.xlu0 %957
    %v960 = vmul.f32 %v943, %v958
    %962 = vrot.lane.b32.xlu0 %v960, 32
    %v963 = vpop.permute.xlu0 %962
    %s965 = scalar_lea.vmem [#allocation10], 32
    %966 = vst.msk [vmem:[%s965] sm:$0xff] %vm90, %v963
    %s967 = sadd.s32 %s259, 4
    %p968 = scmp.eq.s32.totalorder %s967, 7
    // Predicated region
    $region46: #{tpu_custom_call.1} parent=1 // pred_check
      %p969 = pneg %p968
    $region47: #{tpu_custom_call.1} parent=1 // pred_check_branch
      %971 = sbr.rel (%p969) target = $region49
    $region48: #{tpu_custom_call.1} parent=1 // pred_region
      %972 = vst.msk [vmem:[#allocation11] sm:$0xff] %vm90, %v963
      %973 = vst.msk [vmem:[#allocation13] sm:$0xff] %vm90, %v954
    $region49: #{tpu_custom_call.1} parent=1 // pred_fallthru
      _
    %s974 = scalar_lea.vmem [#allocation4], 40
    %v975 = vld [vmem:[%s974] sm:$0xff]
    %v976 = vsel %vm90, %v963, 0
    %978 = vmatprep.subr.mxu0 0.0
    %979 = vmatpush1.msra.mxu0 0.0
    %980 = vmatprep.subr.mxu0 0.0
    %981 = vmatpush1.msra.mxu0 0.0
    %982 = vmatprep.subr.mxu0 0.0
    %983 = vmatpush1.msra.mxu0 0.0
    %984 = vmatprep.subr.mxu0 0.0
    %985 = vmatpush1.msra.mxu0 0.0
    %986 = vmatprep.subr.mxu0 0.0
    %987 = vmatpush1.msra.mxu0 0.0
    %988 = vmatprep.subr.mxu0 0.0
    %989 = vmatpush1.msra.mxu0 0.0
    %990 = vmatprep.subr.mxu0 0.0
    %991 = vmatpush1.msra.mxu0 0.0
    %992 = vmatprep.subr.mxu0 0.0
    %993 = vmatpush1.msra.mxu0 0.0
    %994 = vmatprep.subr.mxu0 0.0
    %995 = vmatpush1.msra.mxu0 0.0
    %996 = vmatprep.subr.mxu0 0.0
    %997 = vmatpush1.msra.mxu0 0.0
    %998 = vmatprep.subr.mxu0 0.0
    %999 = vmatpush1.msra.mxu0 0.0
    %1000 = vmatprep.subr.mxu0 0.0
    %1001 = vmatpush1.msra.mxu0 0.0
    %1002 = vmatprep.subr.mxu0 0.0
    %1003 = vmatpush1.msra.mxu0 %v86
    %1004 = vmatprep.subr.mxu0 0.0
    %1005 = vmatpush1.msra.mxu0 %v85
    %1006 = vmatprep.subr.mxu0 0.0
    %1007 = vmatpush1.msra.mxu0 %v84
    %1008 = vmatprep.subr.mxu0 0.0
    %1009 = vmatpush1.msra.mxu0 %v83
    %1010 = vmatprep.subr.mxu0 0.0
    %1011 = vmatpush2.msra.mxu0 0.0
    %1012 = vmatprep.subr.mxu0 0.0
    %1013 = vmatpush2.msra.mxu0 0.0
    %1014 = vmatprep.subr.mxu0 0.0
    %1015 = vmatpush2.msra.mxu0 0.0
    %1016 = vmatprep.subr.mxu0 0.0
    %1017 = vmatpush2.msra.mxu0 0.0
    %1018 = vmatprep.subr.mxu0 0.0
    %1019 = vmatpush2.msra.mxu0 0.0
    %1020 = vmatprep.subr.mxu0 0.0
    %1021 = vmatpush2.msra.mxu0 0.0
    %1022 = vmatprep.subr.mxu0 0.0
    %1023 = vmatpush2.msra.mxu0 0.0
    %1024 = vmatprep.subr.mxu0 0.0
    %1025 = vmatpush2.msra.mxu0 0.0
    %1026 = vmatprep.subr.mxu0 0.0
    %1027 = vmatpush2.msra.mxu0 0.0
    %1028 = vmatprep.subr.mxu0 0.0
    %1029 = vmatpush2.msra.mxu0 0.0
    %1030 = vmatprep.subr.mxu0 0.0
    %1031 = vmatpush2.msra.mxu0 0.0
    %1032 = vmatprep.subr.mxu0 0.0
    %1033 = vmatpush2.msra.mxu0 0.0
    %1034 = vmatprep.subr.mxu0 0.0
    %1035 = vmatpush2.msra.mxu0 0.0
    %1036 = vmatprep.subr.mxu0 0.0
    %1037 = vmatpush2.msra.mxu0 0.0
    %1038 = vmatprep.subr.mxu0 0.0
    %1039 = vmatpush2.msra.mxu0 0.0
    %1040 = vmatprep.subr.mxu0 0.0
    %1041 = vmatpush2.msra.mxu0 0.0
    %1042 = vmatprep.mubr.f32.mxu0 0.0
    %1043 = vmatmul.mubr.f32.gmra.mxu0 %v976
    %v1044 = vpop.f32.mrf.mxu0
    %v1045 = vadd.f32 0.0, %v1044
    %v1046 = vpop.f32.mrf.mxu0
    %1047 = vdwg.mxu0
    %1048 = vmatprep.subr.mxu0 0.0
    %1049 = vmatpush1.msra.mxu0 %v82
    %1050 = vmatprep.subr.mxu0 0.0
    %1051 = vmatpush1.msra.mxu0 %v81
    %1052 = vmatprep.subr.mxu0 0.0
    %1053 = vmatpush1.msra.mxu0 %v80
    %1054 = vmatprep.subr.mxu0 0.0
    %1055 = vmatpush1.msra.mxu0 %v79
    %1056 = vmatprep.subr.mxu0 0.0
    %1057 = vmatpush1.msra.mxu0 %v78
    %1058 = vmatprep.subr.mxu0 0.0
    %1059 = vmatpush1.msra.mxu0 %v77
    %1060 = vmatprep.subr.mxu0 0.0
    %1061 = vmatpush1.msra.mxu0 %v76
    %1062 = vmatprep.subr.mxu0 0.0
    %1063 = vmatpush1.msra.mxu0 %v75
    %1064 = vmatprep.subr.mxu0 0.0
    %1065 = vmatpush1.msra.mxu0 %v74
    %1066 = vmatprep.subr.mxu0 0.0
    %1067 = vmatpush1.msra.mxu0 %v73
    %1068 = vmatprep.subr.mxu0 0.0
    %1069 = vmatpush1.msra.mxu0 %v72
    %1070 = vmatprep.subr.mxu0 0.0
    %1071 = vmatpush1.msra.mxu0 %v71
    %1072 = vmatprep.subr.mxu0 0.0
    %1073 = vmatpush1.msra.mxu0 %v70
    %1074 = vmatprep.subr.mxu0 0.0
    %1075 = vmatpush1.msra.mxu0 %v69
    %1076 = vmatprep.subr.mxu0 0.0
    %1077 = vmatpush1.msra.mxu0 %v68
    %1078 = vmatprep.subr.mxu0 0.0
    %1079 = vmatpush1.msra.mxu0 %v67
    %1080 = vmatprep.subr.mxu0 0.0
    %1081 = vmatpush2.msra.mxu0 0.0
    %1082 = vmatprep.subr.mxu0 0.0
    %1083 = vmatpush2.msra.mxu0 0.0
    %1084 = vmatprep.subr.mxu0 0.0
    %1085 = vmatpush2.msra.mxu0 0.0
    %1086 = vmatprep.subr.mxu0 0.0
    %1087 = vmatpush2.msra.mxu0 0.0
    %1088 = vmatprep.subr.mxu0 0.0
    %1089 = vmatpush2.msra.mxu0 0.0
    %1090 = vmatprep.subr.mxu0 0.0
    %1091 = vmatpush2.msra.mxu0 0.0
    %1092 = vmatprep.subr.mxu0 0.0
    %1093 = vmatpush2.msra.mxu0 0.0
    %1094 = vmatprep.subr.mxu0 0.0
    %1095 = vmatpush2.msra.mxu0 0.0
    %1096 = vmatprep.subr.mxu0 0.0
    %1097 = vmatpush2.msra.mxu0 0.0
    %1098 = vmatprep.subr.mxu0 0.0
    %1099 = vmatpush2.msra.mxu0 0.0
    %1100 = vmatprep.subr.mxu0 0.0
    %1101 = vmatpush2.msra.mxu0 0.0
    %1102 = vmatprep.subr.mxu0 0.0
    %1103 = vmatpush2.msra.mxu0 0.0
    %1104 = vmatprep.subr.mxu0 0.0
    %1105 = vmatpush2.msra.mxu0 0.0
    %1106 = vmatprep.subr.mxu0 0.0
    %1107 = vmatpush2.msra.mxu0 0.0
    %1108 = vmatprep.subr.mxu0 0.0
    %1109 = vmatpush2.msra.mxu0 0.0
    %1110 = vmatprep.subr.mxu0 0.0
    %1111 = vmatpush2.msra.mxu0 0.0
    %1112 = vmatprep.mubr.f32.mxu0 0.0
    %1113 = vmatmul.mubr.f32.gmra.mxu0 %v975
    %v1114 = vpop.f32.mrf.mxu0
    %v1115 = vadd.f32 %v1045, %v1114
    %v1116 = vpop.f32.mrf.mxu0
    %1117 = vdwg.mxu0
    %v1118 = vtanh.pop %v1115
    %v1119 = vmul.f32 %v1118, 0.5
    %v1120 = vadd.f32 %v1119, 0.5
    %v1121 = vmul.f32 %v1120, %v954
    %1123 = vrot.lane.b32.xlu0 %v1118, 96
    %v1124 = vpop.permute.xlu0 %1123
    %v1126 = vmul.f32 %v1120, %v1124
    %1128 = vrot.lane.b32.xlu0 %v1126, 96
    %v1129 = vpop.permute.xlu0 %1128
    %v1131 = vadd.f32 %v1121, %v1129
    %v1132 = vtanh.pop %v1131
    %1134 = vrot.lane.b32.xlu0 %v1132, 96
    %v1135 = vpop.permute.xlu0 %1134
    %v1137 = vmul.f32 %v1120, %v1135
    %1139 = vrot.lane.b32.xlu0 %v1137, 32
    %v1140 = vpop.permute.xlu0 %1139
    %s1142 = scalar_lea.vmem [#allocation10], 40
    %1143 = vst.msk [vmem:[%s1142] sm:$0xff] %vm90, %v1140
    %s1144 = sadd.s32 %s259, 5
    %p1145 = scmp.eq.s32.totalorder %s1144, 7
    // Predicated region
    $region50: #{tpu_custom_call.1} parent=1 // pred_check
      %p1146 = pneg %p1145
    $region51: #{tpu_custom_call.1} parent=1 // pred_check_branch
      %1148 = sbr.rel (%p1146) target = $region53
    $region52: #{tpu_custom_call.1} parent=1 // pred_region
      %1149 = vst.msk [vmem:[#allocation11] sm:$0xff] %vm90, %v1140
      %1150 = vst.msk [vmem:[#allocation13] sm:$0xff] %vm90, %v1131
    $region53: #{tpu_custom_call.1} parent=1 // pred_fallthru
      _
    %s1151 = scalar_lea.vmem [#allocation4], 48
    %v1152 = vld [vmem:[%s1151] sm:$0xff]
    %v1153 = vsel %vm90, %v1140, 0
    %1155 = vmatprep.subr.mxu0 0.0
    %1156 = vmatpush1.msra.mxu0 0.0
    %1157 = vmatprep.subr.mxu0 0.0
    %1158 = vmatpush1.msra.mxu0 0.0
    %1159 = vmatprep.subr.mxu0 0.0
    %1160 = vmatpush1.msra.mxu0 0.0
    %1161 = vmatprep.subr.mxu0 0.0
    %1162 = vmatpush1.msra.mxu0 0.0
    %1163 = vmatprep.subr.mxu0 0.0
    %1164 = vmatpush1.msra.mxu0 0.0
    %1165 = vmatprep.subr.mxu0 0.0
    %1166 = vmatpush1.msra.mxu0 0.0
    %1167 = vmatprep.subr.mxu0 0.0
    %1168 = vmatpush1.msra.mxu0 0.0
    %1169 = vmatprep.subr.mxu0 0.0
    %1170 = vmatpush1.msra.mxu0 0.0
    %1171 = vmatprep.subr.mxu0 0.0
    %1172 = vmatpush1.msra.mxu0 0.0
    %1173 = vmatprep.subr.mxu0 0.0
    %1174 = vmatpush1.msra.mxu0 0.0
    %1175 = vmatprep.subr.mxu0 0.0
    %1176 = vmatpush1.msra.mxu0 0.0
    %1177 = vmatprep.subr.mxu0 0.0
    %1178 = vmatpush1.msra.mxu0 0.0
    %1179 = vmatprep.subr.mxu0 0.0
    %1180 = vmatpush1.msra.mxu0 %v86
    %1181 = vmatprep.subr.mxu0 0.0
    %1182 = vmatpush1.msra.mxu0 %v85
    %1183 = vmatprep.subr.mxu0 0.0
    %1184 = vmatpush1.msra.mxu0 %v84
    %1185 = vmatprep.subr.mxu0 0.0
    %1186 = vmatpush1.msra.mxu0 %v83
    %1187 = vmatprep.subr.mxu0 0.0
    %1188 = vmatpush2.msra.mxu0 0.0
    %1189 = vmatprep.subr.mxu0 0.0
    %1190 = vmatpush2.msra.mxu0 0.0
    %1191 = vmatprep.subr.mxu0 0.0
    %1192 = vmatpush2.msra.mxu0 0.0
    %1193 = vmatprep.subr.mxu0 0.0
    %1194 = vmatpush2.msra.mxu0 0.0
    %1195 = vmatprep.subr.mxu0 0.0
    %1196 = vmatpush2.msra.mxu0 0.0
    %1197 = vmatprep.subr.mxu0 0.0
    %1198 = vmatpush2.msra.mxu0 0.0
    %1199 = vmatprep.subr.mxu0 0.0
    %1200 = vmatpush2.msra.mxu0 0.0
    %1201 = vmatprep.subr.mxu0 0.0
    %1202 = vmatpush2.msra.mxu0 0.0
    %1203 = vmatprep.subr.mxu0 0.0
    %1204 = vmatpush2.msra.mxu0 0.0
    %1205 = vmatprep.subr.mxu0 0.0
    %1206 = vmatpush2.msra.mxu0 0.0
    %1207 = vmatprep.subr.mxu0 0.0
    %1208 = vmatpush2.msra.mxu0 0.0
    %1209 = vmatprep.subr.mxu0 0.0
    %1210 = vmatpush2.msra.mxu0 0.0
    %1211 = vmatprep.subr.mxu0 0.0
    %1212 = vmatpush2.msra.mxu0 0.0
    %1213 = vmatprep.subr.mxu0 0.0
    %1214 = vmatpush2.msra.mxu0 0.0
    %1215 = vmatprep.subr.mxu0 0.0
    %1216 = vmatpush2.msra.mxu0 0.0
    %1217 = vmatprep.subr.mxu0 0.0
    %1218 = vmatpush2.msra.mxu0 0.0
    %1219 = vmatprep.mubr.f32.mxu0 0.0
    %1220 = vmatmul.mubr.f32.gmra.mxu0 %v1153
    %v1221 = vpop.f32.mrf.mxu0
    %v1222 = vadd.f32 0.0, %v1221
    %v1223 = vpop.f32.mrf.mxu0
    %1224 = vdwg.mxu0
    %1225 = vmatprep.subr.mxu0 0.0
    %1226 = vmatpush1.msra.mxu0 %v82
    %1227 = vmatprep.subr.mxu0 0.0
    %1228 = vmatpush1.msra.mxu0 %v81
    %1229 = vmatprep.subr.mxu0 0.0
    %1230 = vmatpush1.msra.mxu0 %v80
    %1231 = vmatprep.subr.mxu0 0.0
    %1232 = vmatpush1.msra.mxu0 %v79
    %1233 = vmatprep.subr.mxu0 0.0
    %1234 = vmatpush1.msra.mxu0 %v78
    %1235 = vmatprep.subr.mxu0 0.0
    %1236 = vmatpush1.msra.mxu0 %v77
    %1237 = vmatprep.subr.mxu0 0.0
    %1238 = vmatpush1.msra.mxu0 %v76
    %1239 = vmatprep.subr.mxu0 0.0
    %1240 = vmatpush1.msra.mxu0 %v75
    %1241 = vmatprep.subr.mxu0 0.0
    %1242 = vmatpush1.msra.mxu0 %v74
    %1243 = vmatprep.subr.mxu0 0.0
    %1244 = vmatpush1.msra.mxu0 %v73
    %1245 = vmatprep.subr.mxu0 0.0
    %1246 = vmatpush1.msra.mxu0 %v72
    %1247 = vmatprep.subr.mxu0 0.0
    %1248 = vmatpush1.msra.mxu0 %v71
    %1249 = vmatprep.subr.mxu0 0.0
    %1250 = vmatpush1.msra.mxu0 %v70
    %1251 = vmatprep.subr.mxu0 0.0
    %1252 = vmatpush1.msra.mxu0 %v69
    %1253 = vmatprep.subr.mxu0 0.0
    %1254 = vmatpush1.msra.mxu0 %v68
    %1255 = vmatprep.subr.mxu0 0.0
    %1256 = vmatpush1.msra.mxu0 %v67
    %1257 = vmatprep.subr.mxu0 0.0
    %1258 = vmatpush2.msra.mxu0 0.0
    %1259 = vmatprep.subr.mxu0 0.0
    %1260 = vmatpush2.msra.mxu0 0.0
    %1261 = vmatprep.subr.mxu0 0.0
    %1262 = vmatpush2.msra.mxu0 0.0
    %1263 = vmatprep.subr.mxu0 0.0
    %1264 = vmatpush2.msra.mxu0 0.0
    %1265 = vmatprep.subr.mxu0 0.0
    %1266 = vmatpush2.msra.mxu0 0.0
    %1267 = vmatprep.subr.mxu0 0.0
    %1268 = vmatpush2.msra.mxu0 0.0
    %1269 = vmatprep.subr.mxu0 0.0
    %1270 = vmatpush2.msra.mxu0 0.0
    %1271 = vmatprep.subr.mxu0 0.0
    %1272 = vmatpush2.msra.mxu0 0.0
    %1273 = vmatprep.subr.mxu0 0.0
    %1274 = vmatpush2.msra.mxu0 0.0
    %1275 = vmatprep.subr.mxu0 0.0
    %1276 = vmatpush2.msra.mxu0 0.0
    %1277 = vmatprep.subr.mxu0 0.0
    %1278 = vmatpush2.msra.mxu0 0.0
    %1279 = vmatprep.subr.mxu0 0.0
    %1280 = vmatpush2.msra.mxu0 0.0
    %1281 = vmatprep.subr.mxu0 0.0
    %1282 = vmatpush2.msra.mxu0 0.0
    %1283 = vmatprep.subr.mxu0 0.0
    %1284 = vmatpush2.msra.mxu0 0.0
    %1285 = vmatprep.subr.mxu0 0.0
    %1286 = vmatpush2.msra.mxu0 0.0
    %1287 = vmatprep.subr.mxu0 0.0
    %1288 = vmatpush2.msra.mxu0 0.0
    %1289 = vmatprep.mubr.f32.mxu0 0.0
    %1290 = vmatmul.mubr.f32.gmra.mxu0 %v1152
    %v1291 = vpop.f32.mrf.mxu0
    %v1292 = vadd.f32 %v1222, %v1291
    %v1293 = vpop.f32.mrf.mxu0
    %1294 = vdwg.mxu0
    %v1295 = vtanh.pop %v1292
    %v1296 = vmul.f32 %v1295, 0.5
    %v1297 = vadd.f32 %v1296, 0.5
    %v1298 = vmul.f32 %v1297, %v1131
    %1300 = vrot.lane.b32.xlu0 %v1295, 96
    %v1301 = vpop.permute.xlu0 %1300
    %v1303 = vmul.f32 %v1297, %v1301
    %1305 = vrot.lane.b32.xlu0 %v1303, 96
    %v1306 = vpop.permute.xlu0 %1305
    %v1308 = vadd.f32 %v1298, %v1306
    %v1309 = vtanh.pop %v1308
    %1311 = vrot.lane.b32.xlu0 %v1309, 96
    %v1312 = vpop.permute.xlu0 %1311
    %v1314 = vmul.f32 %v1297, %v1312
    %1316 = vrot.lane.b32.xlu0 %v1314, 32
    %v1317 = vpop.permute.xlu0 %1316
    %s1319 = scalar_lea.vmem [#allocation10], 48
    %1320 = vst.msk [vmem:[%s1319] sm:$0xff] %vm90, %v1317
    %s1321 = sadd.s32 %s259, 6
    %p1322 = scmp.eq.s32.totalorder %s1321, 7
    // Predicated region
    $region54: #{tpu_custom_call.1} parent=1 // pred_check
      %p1323 = pneg %p1322
    $region55: #{tpu_custom_call.1} parent=1 // pred_check_branch
      %1325 = sbr.rel (%p1323) target = $region57
    $region56: #{tpu_custom_call.1} parent=1 // pred_region
      %1326 = vst.msk [vmem:[#allocation11] sm:$0xff] %vm90, %v1317
      %1327 = vst.msk [vmem:[#allocation13] sm:$0xff] %vm90, %v1308
    $region57: #{tpu_custom_call.1} parent=1 // pred_fallthru
      _
    %s1328 = scalar_lea.vmem [#allocation4], 56
    %v1329 = vld [vmem:[%s1328] sm:$0xff]
    %v1330 = vsel %vm90, %v1317, 0
    %1332 = vmatprep.subr.mxu0 0.0
    %1333 = vmatpush1.msra.mxu0 0.0
    %1334 = vmatprep.subr.mxu0 0.0
    %1335 = vmatpush1.msra.mxu0 0.0
    %1336 = vmatprep.subr.mxu0 0.0
    %1337 = vmatpush1.msra.mxu0 0.0
    %1338 = vmatprep.subr.mxu0 0.0
    %1339 = vmatpush1.msra.mxu0 0.0
    %1340 = vmatprep.subr.mxu0 0.0
    %1341 = vmatpush1.msra.mxu0 0.0
    %1342 = vmatprep.subr.mxu0 0.0
    %1343 = vmatpush1.msra.mxu0 0.0
    %1344 = vmatprep.subr.mxu0 0.0
    %1345 = vmatpush1.msra.mxu0 0.0
    %1346 = vmatprep.subr.mxu0 0.0
    %1347 = vmatpush1.msra.mxu0 0.0
    %1348 = vmatprep.subr.mxu0 0.0
    %1349 = vmatpush1.msra.mxu0 0.0
    %1350 = vmatprep.subr.mxu0 0.0
    %1351 = vmatpush1.msra.mxu0 0.0
    %1352 = vmatprep.subr.mxu0 0.0
    %1353 = vmatpush1.msra.mxu0 0.0
    %1354 = vmatprep.subr.mxu0 0.0
    %1355 = vmatpush1.msra.mxu0 0.0
    %1356 = vmatprep.subr.mxu0 0.0
    %1357 = vmatpush1.msra.mxu0 %v86
    %1358 = vmatprep.subr.mxu0 0.0
    %1359 = vmatpush1.msra.mxu0 %v85
    %1360 = vmatprep.subr.mxu0 0.0
    %1361 = vmatpush1.msra.mxu0 %v84
    %1362 = vmatprep.subr.mxu0 0.0
    %1363 = vmatpush1.msra.mxu0 %v83
    %1364 = vmatprep.subr.mxu0 0.0
    %1365 = vmatpush2.msra.mxu0 0.0
    %1366 = vmatprep.subr.mxu0 0.0
    %1367 = vmatpush2.msra.mxu0 0.0
    %1368 = vmatprep.subr.mxu0 0.0
    %1369 = vmatpush2.msra.mxu0 0.0
    %1370 = vmatprep.subr.mxu0 0.0
    %1371 = vmatpush2.msra.mxu0 0.0
    %1372 = vmatprep.subr.mxu0 0.0
    %1373 = vmatpush2.msra.mxu0 0.0
    %1374 = vmatprep.subr.mxu0 0.0
    %1375 = vmatpush2.msra.mxu0 0.0
    %1376 = vmatprep.subr.mxu0 0.0
    %1377 = vmatpush2.msra.mxu0 0.0
    %1378 = vmatprep.subr.mxu0 0.0
    %1379 = vmatpush2.msra.mxu0 0.0
    %1380 = vmatprep.subr.mxu0 0.0
    %1381 = vmatpush2.msra.mxu0 0.0
    %1382 = vmatprep.subr.mxu0 0.0
    %1383 = vmatpush2.msra.mxu0 0.0
    %1384 = vmatprep.subr.mxu0 0.0
    %1385 = vmatpush2.msra.mxu0 0.0
    %1386 = vmatprep.subr.mxu0 0.0
    %1387 = vmatpush2.msra.mxu0 0.0
    %1388 = vmatprep.subr.mxu0 0.0
    %1389 = vmatpush2.msra.mxu0 0.0
    %1390 = vmatprep.subr.mxu0 0.0
    %1391 = vmatpush2.msra.mxu0 0.0
    %1392 = vmatprep.subr.mxu0 0.0
    %1393 = vmatpush2.msra.mxu0 0.0
    %1394 = vmatprep.subr.mxu0 0.0
    %1395 = vmatpush2.msra.mxu0 0.0
    %1396 = vmatprep.mubr.f32.mxu0 0.0
    %1397 = vmatmul.mubr.f32.gmra.mxu0 %v1330
    %v1398 = vpop.f32.mrf.mxu0
    %v1399 = vadd.f32 0.0, %v1398
    %v1400 = vpop.f32.mrf.mxu0
    %1401 = vdwg.mxu0
    %1402 = vmatprep.subr.mxu0 0.0
    %1403 = vmatpush1.msra.mxu0 %v82
    %1404 = vmatprep.subr.mxu0 0.0
    %1405 = vmatpush1.msra.mxu0 %v81
    %1406 = vmatprep.subr.mxu0 0.0
    %1407 = vmatpush1.msra.mxu0 %v80
    %1408 = vmatprep.subr.mxu0 0.0
    %1409 = vmatpush1.msra.mxu0 %v79
    %1410 = vmatprep.subr.mxu0 0.0
    %1411 = vmatpush1.msra.mxu0 %v78
    %1412 = vmatprep.subr.mxu0 0.0
    %1413 = vmatpush1.msra.mxu0 %v77
    %1414 = vmatprep.subr.mxu0 0.0
    %1415 = vmatpush1.msra.mxu0 %v76
    %1416 = vmatprep.subr.mxu0 0.0
    %1417 = vmatpush1.msra.mxu0 %v75
    %1418 = vmatprep.subr.mxu0 0.0
    %1419 = vmatpush1.msra.mxu0 %v74
    %1420 = vmatprep.subr.mxu0 0.0
    %1421 = vmatpush1.msra.mxu0 %v73
    %1422 = vmatprep.subr.mxu0 0.0
    %1423 = vmatpush1.msra.mxu0 %v72
    %1424 = vmatprep.subr.mxu0 0.0
    %1425 = vmatpush1.msra.mxu0 %v71
    %1426 = vmatprep.subr.mxu0 0.0
    %1427 = vmatpush1.msra.mxu0 %v70
    %1428 = vmatprep.subr.mxu0 0.0
    %1429 = vmatpush1.msra.mxu0 %v69
    %1430 = vmatprep.subr.mxu0 0.0
    %1431 = vmatpush1.msra.mxu0 %v68
    %1432 = vmatprep.subr.mxu0 0.0
    %1433 = vmatpush1.msra.mxu0 %v67
    %1434 = vmatprep.subr.mxu0 0.0
    %1435 = vmatpush2.msra.mxu0 0.0
    %1436 = vmatprep.subr.mxu0 0.0
    %1437 = vmatpush2.msra.mxu0 0.0
    %1438 = vmatprep.subr.mxu0 0.0
    %1439 = vmatpush2.msra.mxu0 0.0
    %1440 = vmatprep.subr.mxu0 0.0
    %1441 = vmatpush2.msra.mxu0 0.0
    %1442 = vmatprep.subr.mxu0 0.0
    %1443 = vmatpush2.msra.mxu0 0.0
    %1444 = vmatprep.subr.mxu0 0.0
    %1445 = vmatpush2.msra.mxu0 0.0
    %1446 = vmatprep.subr.mxu0 0.0
    %1447 = vmatpush2.msra.mxu0 0.0
    %1448 = vmatprep.subr.mxu0 0.0
    %1449 = vmatpush2.msra.mxu0 0.0
    %1450 = vmatprep.subr.mxu0 0.0
    %1451 = vmatpush2.msra.mxu0 0.0
    %1452 = vmatprep.subr.mxu0 0.0
    %1453 = vmatpush2.msra.mxu0 0.0
    %1454 = vmatprep.subr.mxu0 0.0
    %1455 = vmatpush2.msra.mxu0 0.0
    %1456 = vmatprep.subr.mxu0 0.0
    %1457 = vmatpush2.msra.mxu0 0.0
    %1458 = vmatprep.subr.mxu0 0.0
    %1459 = vmatpush2.msra.mxu0 0.0
    %1460 = vmatprep.subr.mxu0 0.0
    %1461 = vmatpush2.msra.mxu0 0.0
    %1462 = vmatprep.subr.mxu0 0.0
    %1463 = vmatpush2.msra.mxu0 0.0
    %1464 = vmatprep.subr.mxu0 0.0
    %1465 = vmatpush2.msra.mxu0 0.0
    %1466 = vmatprep.mubr.f32.mxu0 0.0
    %1467 = vmatmul.mubr.f32.gmra.mxu0 %v1329
    %v1468 = vpop.f32.mrf.mxu0
    %v1469 = vadd.f32 %v1399, %v1468
    %v1470 = vpop.f32.mrf.mxu0
    %1471 = vdwg.mxu0
    %v1472 = vtanh.pop %v1469
    %v1473 = vmul.f32 %v1472, 0.5
    %v1474 = vadd.f32 %v1473, 0.5
    %v1475 = vmul.f32 %v1474, %v1308
    %1477 = vrot.lane.b32.xlu0 %v1472, 96
    %v1478 = vpop.permute.xlu0 %1477
    %v1480 = vmul.f32 %v1474, %v1478
    %1482 = vrot.lane.b32.xlu0 %v1480, 96
    %v1483 = vpop.permute.xlu0 %1482
    %v1485 = vadd.f32 %v1475, %v1483
    %v1486 = vtanh.pop %v1485
    %1488 = vrot.lane.b32.xlu0 %v1486, 96
    %v1489 = vpop.permute.xlu0 %1488
    %v1491 = vmul.f32 %v1474, %v1489
    %1493 = vrot.lane.b32.xlu0 %v1491, 32
    %v1494 = vpop.permute.xlu0 %1493
    %s1496 = scalar_lea.vmem [#allocation10], 56
    %1497 = vst.msk [vmem:[%s1496] sm:$0xff] %vm90, %v1494
    %s1498 = sadd.s32 %s259, 7
    %p1499 = scmp.eq.s32.totalorder %s1498, 7
    // Predicated region
    $region58: #{tpu_custom_call.1} parent=1 // pred_check
      %p1500 = pneg %p1499
    $region59: #{tpu_custom_call.1} parent=1 // pred_check_branch
      %1502 = sbr.rel (%p1500) target = $region61
    $region60: #{tpu_custom_call.1} parent=1 // pred_region
      %1503 = vst.msk [vmem:[#allocation11] sm:$0xff] %vm90, %v1494
      %1504 = vst.msk [vmem:[#allocation13] sm:$0xff] %vm90, %v1485
    $region61: #{tpu_custom_call.1} parent=1 // pred_fallthru
      _
    %1505 = vst.msk [vmem:[#allocation2] sm:$0xff] %vm90, %v1494
    %1506 = vst.msk [vmem:[#allocation3] sm:$0xff] %vm90, %v1485
    // Predicated region
    $region62: #{tpu_custom_call.1} parent=1 // pred_check
      _
    $region63: #{tpu_custom_call.1} parent=1 // pred_check_branch
      %1508 = sbr.rel (0) target = $region65
    $region64: #{tpu_custom_call.1} parent=1 // pred_region
      %s1510 = ssub.s32 1024, 1024
      %1511 = vsyncadd [#allocation6], %s1510
      %s1512 = sshll.u32 [#allocation10], 4
      %s1513 = int_to_ptr.vmem [resolvable:$true] %s1512
      %1518 = dma.vmem_to_hbm [thread:$0]  %s1513, 1024, %s3, [#allocation6], 128, 128, 8
    $region65: #{tpu_custom_call.1} parent=1 // pred_fallthru
      _
    // Predicated region
    $region66: #{tpu_custom_call.1} parent=1 // pred_check
      _
    $region67: #{tpu_custom_call.1} parent=1 // pred_check_branch
      %1520 = sbr.rel (0) target = $region69
    $region68: #{tpu_custom_call.1} parent=1 // pred_region
      %s1522 = ssub.s32 128, 128
      %1523 = vsyncadd [#allocation12], %s1522
      %s1525 = sshll.u32 [#allocation11], 4
      %s1526 = int_to_ptr.vmem [resolvable:$true] %s1525
      %1528 = dma.vmem_to_hbm [thread:$0]  %s1526, 128, %s4, [#allocation12]
    $region69: #{tpu_custom_call.1} parent=1 // pred_fallthru
      _
    // Predicated region
    $region70: #{tpu_custom_call.1} parent=1 // pred_check
      _
    $region71: #{tpu_custom_call.1} parent=1 // pred_check_branch
      %1530 = sbr.rel (0) target = $region73
    $region72: #{tpu_custom_call.1} parent=1 // pred_region
      %s1532 = ssub.s32 128, 128
      %1533 = vsyncadd [#allocation12], %s1532
      %s1535 = sshll.u32 [#allocation13], 4
      %s1536 = int_to_ptr.vmem [resolvable:$true] %s1535
      %1538 = dma.vmem_to_hbm [thread:$0]  %s1536, 128, %s5, [#allocation12]
    $region73: #{tpu_custom_call.1} parent=1 // pred_fallthru
      _
    // Predicated region
    $region74: #{tpu_custom_call.1} parent=1 // pred_check
      _
    $region75: #{tpu_custom_call.1} parent=1 // pred_check_branch
      %1540 = sbr.rel (0) target = $region77
    $region76: #{tpu_custom_call.1} parent=1 // pred_region
      %1541 = dma.done [#allocation6], 1024
    $region77: #{tpu_custom_call.1} parent=1 // pred_fallthru
      _
    // Predicated region
    $region78: #{tpu_custom_call.1} parent=1 // pred_check
      _
    $region79: #{tpu_custom_call.1} parent=1 // pred_check_branch
      %1543 = sbr.rel (0) target = $region81
    $region80: #{tpu_custom_call.1} parent=1 // pred_region
      %1544 = dma.done [#allocation12], 128
    $region81: #{tpu_custom_call.1} parent=1 // pred_fallthru
      _
    // Predicated region
    $region82: #{tpu_custom_call.1} parent=1 // pred_check
      _
    $region83: #{tpu_custom_call.1} parent=1 // pred_check_branch
      %1546 = sbr.rel (0) target = $region85
    $region84: #{tpu_custom_call.1} parent=1 // pred_region
      %1547 = dma.done [#allocation12], 128
    $region85: #{tpu_custom_call.1} parent=1 // pred_fallthru
      _
    %1548 = vsyncpa [#allocation5], 1
    %1549 = vsyncpa [#allocation8], 1
    %1550 = vsyncpa [#allocation6], 1
    %1551 = vsyncpa [#allocation12], 1

</llo_original>
